<compile_context>
chip_gen: v5e
topology: v5e:2x2
jax: 0.10.0
libtpu: 0.0.40
codegen_flags: <defaults>
</compile_context>

<pallas_src>
import jax
import jax.numpy as jnp
from jax.experimental import pallas as pl
from jax.experimental.pallas import tpu as pltpu

BN_EPS = 1e-5


def conv_bn_forward(x3, x4, conv_w, conv_b, bn_gamma, bn_beta):
    """Equivalent of Model.forward(x3, x4). x3 is unused (matching PyTorch)."""
    del x3
    n, c_in, h, w = x4.shape
    c_out, _, kh, kw = conv_w.shape
    oh, ow = h - kh + 1, w - kw + 1
    kk = c_in * kh * kw
    inv_m = 1.0 / float(n * oh * ow)

    # All scalar parameters collapsed into two small SMEM vectors:
    #   w_flat: (C_out*C_in*KH*KW,)    p_flat: [bias | gamma | beta]  (3*C_out,)
    w_flat = conv_w.reshape(-1).astype(jnp.float32)
    p_flat = jnp.concatenate([conv_b, bn_gamma, bn_beta]).astype(jnp.float32)

    def kernel(x_ref, w_ref, p_ref, o_ref):
        # x_ref: (N, C_in, H, W) VMEM   w_ref/p_ref: SMEM scalars
        # o_ref: (N, C_out, OH, OW) VMEM  (final NCHW layout)

        # In-kernel im2col: 27 shifted windows, shared by all output channels.
        wins = []
        for ci in range(c_in):
            for i in range(kh):
                for j in range(kw):
                    wins.append(x_ref[:, ci, i:i + oh, j:j + ow])  # (N,OH,OW)

        for c in range(c_out):
            # Conv2d as VPU scalar*vector FMAs (no MXU for this tiny shape).
            acc = jnp.zeros((n, oh, ow), dtype=jnp.float32)
            for k, win in enumerate(wins):
                acc = acc + w_ref[c * kk + k] * win
            acc = acc + p_ref[c]                       # conv bias

            # BatchNorm2d training-mode stats, single pass per channel.
            s = jnp.sum(acc)
            ss = jnp.sum(acc * acc)
            mean = s * inv_m
            var = ss * inv_m - mean * mean             # biased variance
            inv_std = jax.lax.rsqrt(var + BN_EPS)
            scale = inv_std * p_ref[c_out + c]         # * gamma
            shift = p_ref[2 * c_out + c] - mean * scale  # + beta

            o_ref[:, c, :, :] = (acc * scale + shift).astype(o_ref.dtype)

    return pl.pallas_call(
        kernel,
        out_shape=jax.ShapeDtypeStruct((n, c_out, oh, ow), jnp.float32),
        in_specs=[
            pl.BlockSpec(memory_space=pltpu.MemorySpace.VMEM),   # x4 (whole array)
            pl.BlockSpec(memory_space=pltpu.MemorySpace.SMEM),   # conv weights
            pl.BlockSpec(memory_space=pltpu.MemorySpace.SMEM),   # bias/gamma/beta
        ],
        out_specs=pl.BlockSpec(memory_space=pltpu.MemorySpace.VMEM),
    )(x4.astype(jnp.float32), w_flat, p_flat)


if __name__ == "__main__":
    key = jax.random.PRNGKey(0)
    k_x3, k_x4, k_w, k_b = jax.random.split(key, 4)

    # Small shapes consistent with the module: Conv2d(3 -> 3, kernel 3).
    N, C_IN, H, W = 2, 3, 8, 8
    C_OUT, KH, KW = 3, 3, 3

    x3 = jax.random.normal(k_x3, (N, C_IN, H, W), dtype=jnp.float32)  # unused
    x4 = jax.random.normal(k_x4, (N, C_IN, H, W), dtype=jnp.float32)

    fan_in = C_IN * KH * KW
    conv_w = jax.random.normal(k_w, (C_OUT, C_IN, KH, KW),
                               dtype=jnp.float32) * (1.0 / fan_in) ** 0.5
    conv_b = jax.random.normal(k_b, (C_OUT,), dtype=jnp.float32) * 0.1
    bn_gamma = jnp.ones((C_OUT,), dtype=jnp.float32)   # PyTorch default
    bn_beta = jnp.zeros((C_OUT,), dtype=jnp.float32)   # PyTorch default

    out = conv_bn_forward(x3, x4, conv_w, conv_b, bn_gamma, bn_beta)
    out = jax.block_until_ready(out)
    assert out.shape == (N, C_OUT, H - KH + 1, W - KW + 1)

    # Pure-JAX reference: Conv2d + training-mode BatchNorm2d.
    y_ref = jax.lax.conv_general_dilated(
        x4, conv_w, window_strides=(1, 1), padding="VALID",
        dimension_numbers=("NCHW", "OIHW", "NCHW"),
    ) + conv_b.reshape(1, -1, 1, 1)
    m_ref = y_ref.mean(axis=(0, 2, 3), keepdims=True)
    v_ref = ((y_ref - m_ref) ** 2).mean(axis=(0, 2, 3), keepdims=True)
    ref = ((y_ref - m_ref) * jax.lax.rsqrt(v_ref + BN_EPS)
           * bn_gamma.reshape(1, -1, 1, 1) + bn_beta.reshape(1, -1, 1, 1))
    assert jnp.allclose(out, ref, atol=1e-4, rtol=1e-4)

    print("KERNEL_OK")
</pallas_src>

<mosaic_0001>
module attributes {stable_mosaic.version = 11 : i64} {
  func.func @kernel(%arg0: memref<2x3x8x8xf32, #tpu.memory_space<vmem>>, %arg1: memref<81xf32, #tpu.memory_space<smem>>, %arg2: memref<9xf32, #tpu.memory_space<smem>>, %arg3: memref<2x3x6x6xf32, #tpu.memory_space<vmem>>) attributes {dimension_semantics = [], scalar_prefetch = 0 : i64, scratch_operands = 0 : i64, tpu.core_type = #tpu.core_type<tc>} {
    %c0 = arith.constant 0 : index
    %c0_0 = arith.constant 0 : index
    %c0_1 = arith.constant 0 : index
    %c0_2 = arith.constant 0 : index
    %0 = vector.load %arg0[%c0, %c0_0, %c0_1, %c0_2] : memref<2x3x8x8xf32, #tpu.memory_space<vmem>>, vector<2x1x6x6xf32>
    %1 = vector.shape_cast %0 : vector<2x1x6x6xf32> to vector<2x6x6xf32>
    %c0_3 = arith.constant 0 : index
    %c0_4 = arith.constant 0 : index
    %c0_5 = arith.constant 0 : index
    %c1 = arith.constant 1 : index
    %2 = vector.load %arg0[%c0_3, %c0_4, %c0_5, %c1] : memref<2x3x8x8xf32, #tpu.memory_space<vmem>>, vector<2x1x6x6xf32>
    %3 = vector.shape_cast %2 : vector<2x1x6x6xf32> to vector<2x6x6xf32>
    %c0_6 = arith.constant 0 : index
    %c0_7 = arith.constant 0 : index
    %c0_8 = arith.constant 0 : index
    %c2 = arith.constant 2 : index
    %4 = vector.load %arg0[%c0_6, %c0_7, %c0_8, %c2] : memref<2x3x8x8xf32, #tpu.memory_space<vmem>>, vector<2x1x6x6xf32>
    %5 = vector.shape_cast %4 : vector<2x1x6x6xf32> to vector<2x6x6xf32>
    %c0_9 = arith.constant 0 : index
    %c0_10 = arith.constant 0 : index
    %c1_11 = arith.constant 1 : index
    %c0_12 = arith.constant 0 : index
    %6 = vector.load %arg0[%c0_9, %c0_10, %c1_11, %c0_12] : memref<2x3x8x8xf32, #tpu.memory_space<vmem>>, vector<2x1x6x6xf32>
    %7 = vector.shape_cast %6 : vector<2x1x6x6xf32> to vector<2x6x6xf32>
    %c0_13 = arith.constant 0 : index
    %c0_14 = arith.constant 0 : index
    %c1_15 = arith.constant 1 : index
    %c1_16 = arith.constant 1 : index
    %8 = vector.load %arg0[%c0_13, %c0_14, %c1_15, %c1_16] : memref<2x3x8x8xf32, #tpu.memory_space<vmem>>, vector<2x1x6x6xf32>
    %9 = vector.shape_cast %8 : vector<2x1x6x6xf32> to vector<2x6x6xf32>
    %c0_17 = arith.constant 0 : index
    %c0_18 = arith.constant 0 : index
    %c1_19 = arith.constant 1 : index
    %c2_20 = arith.constant 2 : index
    %10 = vector.load %arg0[%c0_17, %c0_18, %c1_19, %c2_20] : memref<2x3x8x8xf32, #tpu.memory_space<vmem>>, vector<2x1x6x6xf32>
    %11 = vector.shape_cast %10 : vector<2x1x6x6xf32> to vector<2x6x6xf32>
    %c0_21 = arith.constant 0 : index
    %c0_22 = arith.constant 0 : index
    %c2_23 = arith.constant 2 : index
    %c0_24 = arith.constant 0 : index
    %12 = vector.load %arg0[%c0_21, %c0_22, %c2_23, %c0_24] : memref<2x3x8x8xf32, #tpu.memory_space<vmem>>, vector<2x1x6x6xf32>
    %13 = vector.shape_cast %12 : vector<2x1x6x6xf32> to vector<2x6x6xf32>
    %c0_25 = arith.constant 0 : index
    %c0_26 = arith.constant 0 : index
    %c2_27 = arith.constant 2 : index
    %c1_28 = arith.constant 1 : index
    %14 = vector.load %arg0[%c0_25, %c0_26, %c2_27, %c1_28] : memref<2x3x8x8xf32, #tpu.memory_space<vmem>>, vector<2x1x6x6xf32>
    %15 = vector.shape_cast %14 : vector<2x1x6x6xf32> to vector<2x6x6xf32>
    %c0_29 = arith.constant 0 : index
    %c0_30 = arith.constant 0 : index
    %c2_31 = arith.constant 2 : index
    %c2_32 = arith.constant 2 : index
    %16 = vector.load %arg0[%c0_29, %c0_30, %c2_31, %c2_32] : memref<2x3x8x8xf32, #tpu.memory_space<vmem>>, vector<2x1x6x6xf32>
    %17 = vector.shape_cast %16 : vector<2x1x6x6xf32> to vector<2x6x6xf32>
    %c0_33 = arith.constant 0 : index
    %c1_34 = arith.constant 1 : index
    %c0_35 = arith.constant 0 : index
    %c0_36 = arith.constant 0 : index
    %18 = vector.load %arg0[%c0_33, %c1_34, %c0_35, %c0_36] : memref<2x3x8x8xf32, #tpu.memory_space<vmem>>, vector<2x1x6x6xf32>
    %19 = vector.shape_cast %18 : vector<2x1x6x6xf32> to vector<2x6x6xf32>
    %c0_37 = arith.constant 0 : index
    %c1_38 = arith.constant 1 : index
    %c0_39 = arith.constant 0 : index
    %c1_40 = arith.constant 1 : index
    %20 = vector.load %arg0[%c0_37, %c1_38, %c0_39, %c1_40] : memref<2x3x8x8xf32, #tpu.memory_space<vmem>>, vector<2x1x6x6xf32>
    %21 = vector.shape_cast %20 : vector<2x1x6x6xf32> to vector<2x6x6xf32>
    %c0_41 = arith.constant 0 : index
    %c1_42 = arith.constant 1 : index
    %c0_43 = arith.constant 0 : index
    %c2_44 = arith.constant 2 : index
    %22 = vector.load %arg0[%c0_41, %c1_42, %c0_43, %c2_44] : memref<2x3x8x8xf32, #tpu.memory_space<vmem>>, vector<2x1x6x6xf32>
    %23 = vector.shape_cast %22 : vector<2x1x6x6xf32> to vector<2x6x6xf32>
    %c0_45 = arith.constant 0 : index
    %c1_46 = arith.constant 1 : index
    %c1_47 = arith.constant 1 : index
    %c0_48 = arith.constant 0 : index
    %24 = vector.load %arg0[%c0_45, %c1_46, %c1_47, %c0_48] : memref<2x3x8x8xf32, #tpu.memory_space<vmem>>, vector<2x1x6x6xf32>
    %25 = vector.shape_cast %24 : vector<2x1x6x6xf32> to vector<2x6x6xf32>
    %c0_49 = arith.constant 0 : index
    %c1_50 = arith.constant 1 : index
    %c1_51 = arith.constant 1 : index
    %c1_52 = arith.constant 1 : index
    %26 = vector.load %arg0[%c0_49, %c1_50, %c1_51, %c1_52] : memref<2x3x8x8xf32, #tpu.memory_space<vmem>>, vector<2x1x6x6xf32>
    %27 = vector.shape_cast %26 : vector<2x1x6x6xf32> to vector<2x6x6xf32>
    %c0_53 = arith.constant 0 : index
    %c1_54 = arith.constant 1 : index
    %c1_55 = arith.constant 1 : index
    %c2_56 = arith.constant 2 : index
    %28 = vector.load %arg0[%c0_53, %c1_54, %c1_55, %c2_56] : memref<2x3x8x8xf32, #tpu.memory_space<vmem>>, vector<2x1x6x6xf32>
    %29 = vector.shape_cast %28 : vector<2x1x6x6xf32> to vector<2x6x6xf32>
    %c0_57 = arith.constant 0 : index
    %c1_58 = arith.constant 1 : index
    %c2_59 = arith.constant 2 : index
    %c0_60 = arith.constant 0 : index
    %30 = vector.load %arg0[%c0_57, %c1_58, %c2_59, %c0_60] : memref<2x3x8x8xf32, #tpu.memory_space<vmem>>, vector<2x1x6x6xf32>
    %31 = vector.shape_cast %30 : vector<2x1x6x6xf32> to vector<2x6x6xf32>
    %c0_61 = arith.constant 0 : index
    %c1_62 = arith.constant 1 : index
    %c2_63 = arith.constant 2 : index
    %c1_64 = arith.constant 1 : index
    %32 = vector.load %arg0[%c0_61, %c1_62, %c2_63, %c1_64] : memref<2x3x8x8xf32, #tpu.memory_space<vmem>>, vector<2x1x6x6xf32>
    %33 = vector.shape_cast %32 : vector<2x1x6x6xf32> to vector<2x6x6xf32>
    %c0_65 = arith.constant 0 : index
    %c1_66 = arith.constant 1 : index
    %c2_67 = arith.constant 2 : index
    %c2_68 = arith.constant 2 : index
    %34 = vector.load %arg0[%c0_65, %c1_66, %c2_67, %c2_68] : memref<2x3x8x8xf32, #tpu.memory_space<vmem>>, vector<2x1x6x6xf32>
    %35 = vector.shape_cast %34 : vector<2x1x6x6xf32> to vector<2x6x6xf32>
    %c0_69 = arith.constant 0 : index
    %c2_70 = arith.constant 2 : index
    %c0_71 = arith.constant 0 : index
    %c0_72 = arith.constant 0 : index
    %36 = vector.load %arg0[%c0_69, %c2_70, %c0_71, %c0_72] : memref<2x3x8x8xf32, #tpu.memory_space<vmem>>, vector<2x1x6x6xf32>
    %37 = vector.shape_cast %36 : vector<2x1x6x6xf32> to vector<2x6x6xf32>
    %c0_73 = arith.constant 0 : index
    %c2_74 = arith.constant 2 : index
    %c0_75 = arith.constant 0 : index
    %c1_76 = arith.constant 1 : index
    %38 = vector.load %arg0[%c0_73, %c2_74, %c0_75, %c1_76] : memref<2x3x8x8xf32, #tpu.memory_space<vmem>>, vector<2x1x6x6xf32>
    %39 = vector.shape_cast %38 : vector<2x1x6x6xf32> to vector<2x6x6xf32>
    %c0_77 = arith.constant 0 : index
    %c2_78 = arith.constant 2 : index
    %c0_79 = arith.constant 0 : index
    %c2_80 = arith.constant 2 : index
    %40 = vector.load %arg0[%c0_77, %c2_78, %c0_79, %c2_80] : memref<2x3x8x8xf32, #tpu.memory_space<vmem>>, vector<2x1x6x6xf32>
    %41 = vector.shape_cast %40 : vector<2x1x6x6xf32> to vector<2x6x6xf32>
    %c0_81 = arith.constant 0 : index
    %c2_82 = arith.constant 2 : index
    %c1_83 = arith.constant 1 : index
    %c0_84 = arith.constant 0 : index
    %42 = vector.load %arg0[%c0_81, %c2_82, %c1_83, %c0_84] : memref<2x3x8x8xf32, #tpu.memory_space<vmem>>, vector<2x1x6x6xf32>
    %43 = vector.shape_cast %42 : vector<2x1x6x6xf32> to vector<2x6x6xf32>
    %c0_85 = arith.constant 0 : index
    %c2_86 = arith.constant 2 : index
    %c1_87 = arith.constant 1 : index
    %c1_88 = arith.constant 1 : index
    %44 = vector.load %arg0[%c0_85, %c2_86, %c1_87, %c1_88] : memref<2x3x8x8xf32, #tpu.memory_space<vmem>>, vector<2x1x6x6xf32>
    %45 = vector.shape_cast %44 : vector<2x1x6x6xf32> to vector<2x6x6xf32>
    %c0_89 = arith.constant 0 : index
    %c2_90 = arith.constant 2 : index
    %c1_91 = arith.constant 1 : index
    %c2_92 = arith.constant 2 : index
    %46 = vector.load %arg0[%c0_89, %c2_90, %c1_91, %c2_92] : memref<2x3x8x8xf32, #tpu.memory_space<vmem>>, vector<2x1x6x6xf32>
    %47 = vector.shape_cast %46 : vector<2x1x6x6xf32> to vector<2x6x6xf32>
    %c0_93 = arith.constant 0 : index
    %c2_94 = arith.constant 2 : index
    %c2_95 = arith.constant 2 : index
    %c0_96 = arith.constant 0 : index
    %48 = vector.load %arg0[%c0_93, %c2_94, %c2_95, %c0_96] : memref<2x3x8x8xf32, #tpu.memory_space<vmem>>, vector<2x1x6x6xf32>
    %49 = vector.shape_cast %48 : vector<2x1x6x6xf32> to vector<2x6x6xf32>
    %c0_97 = arith.constant 0 : index
    %c2_98 = arith.constant 2 : index
    %c2_99 = arith.constant 2 : index
    %c1_100 = arith.constant 1 : index
    %50 = vector.load %arg0[%c0_97, %c2_98, %c2_99, %c1_100] : memref<2x3x8x8xf32, #tpu.memory_space<vmem>>, vector<2x1x6x6xf32>
    %51 = vector.shape_cast %50 : vector<2x1x6x6xf32> to vector<2x6x6xf32>
    %c0_101 = arith.constant 0 : index
    %c2_102 = arith.constant 2 : index
    %c2_103 = arith.constant 2 : index
    %c2_104 = arith.constant 2 : index
    %52 = vector.load %arg0[%c0_101, %c2_102, %c2_103, %c2_104] : memref<2x3x8x8xf32, #tpu.memory_space<vmem>>, vector<2x1x6x6xf32>
    %53 = vector.shape_cast %52 : vector<2x1x6x6xf32> to vector<2x6x6xf32>
    %cst = arith.constant 0.000000e+00 : f32
    %54 = vector.broadcast %cst : f32 to vector<2x6x6xf32>
    %c0_105 = arith.constant 0 : index
    %55 = memref.load %arg1[%c0_105] : memref<81xf32, #tpu.memory_space<smem>>
    %56 = vector.broadcast %55 : f32 to vector<2x6x6xf32>
    %57 = arith.mulf %56, %1 : vector<2x6x6xf32>
    %58 = arith.addf %54, %57 : vector<2x6x6xf32>
    %c1_106 = arith.constant 1 : index
    %59 = memref.load %arg1[%c1_106] : memref<81xf32, #tpu.memory_space<smem>>
    %60 = vector.broadcast %59 : f32 to vector<2x6x6xf32>
    %61 = arith.mulf %60, %3 : vector<2x6x6xf32>
    %62 = arith.addf %58, %61 : vector<2x6x6xf32>
    %c2_107 = arith.constant 2 : index
    %63 = memref.load %arg1[%c2_107] : memref<81xf32, #tpu.memory_space<smem>>
    %64 = vector.broadcast %63 : f32 to vector<2x6x6xf32>
    %65 = arith.mulf %64, %5 : vector<2x6x6xf32>
    %66 = arith.addf %62, %65 : vector<2x6x6xf32>
    %c3 = arith.constant 3 : index
    %67 = memref.load %arg1[%c3] : memref<81xf32, #tpu.memory_space<smem>>
    %68 = vector.broadcast %67 : f32 to vector<2x6x6xf32>
    %69 = arith.mulf %68, %7 : vector<2x6x6xf32>
    %70 = arith.addf %66, %69 : vector<2x6x6xf32>
    %c4 = arith.constant 4 : index
    %71 = memref.load %arg1[%c4] : memref<81xf32, #tpu.memory_space<smem>>
    %72 = vector.broadcast %71 : f32 to vector<2x6x6xf32>
    %73 = arith.mulf %72, %9 : vector<2x6x6xf32>
    %74 = arith.addf %70, %73 : vector<2x6x6xf32>
    %c5 = arith.constant 5 : index
    %75 = memref.load %arg1[%c5] : memref<81xf32, #tpu.memory_space<smem>>
    %76 = vector.broadcast %75 : f32 to vector<2x6x6xf32>
    %77 = arith.mulf %76, %11 : vector<2x6x6xf32>
    %78 = arith.addf %74, %77 : vector<2x6x6xf32>
    %c6 = arith.constant 6 : index
    %79 = memref.load %arg1[%c6] : memref<81xf32, #tpu.memory_space<smem>>
    %80 = vector.broadcast %79 : f32 to vector<2x6x6xf32>
    %81 = arith.mulf %80, %13 : vector<2x6x6xf32>
    %82 = arith.addf %78, %81 : vector<2x6x6xf32>
    %c7 = arith.constant 7 : index
    %83 = memref.load %arg1[%c7] : memref<81xf32, #tpu.memory_space<smem>>
    %84 = vector.broadcast %83 : f32 to vector<2x6x6xf32>
    %85 = arith.mulf %84, %15 : vector<2x6x6xf32>
    %86 = arith.addf %82, %85 : vector<2x6x6xf32>
    %c8 = arith.constant 8 : index
    %87 = memref.load %arg1[%c8] : memref<81xf32, #tpu.memory_space<smem>>
    %88 = vector.broadcast %87 : f32 to vector<2x6x6xf32>
    %89 = arith.mulf %88, %17 : vector<2x6x6xf32>
    %90 = arith.addf %86, %89 : vector<2x6x6xf32>
    %c9 = arith.constant 9 : index
    %91 = memref.load %arg1[%c9] : memref<81xf32, #tpu.memory_space<smem>>
    %92 = vector.broadcast %91 : f32 to vector<2x6x6xf32>
    %93 = arith.mulf %92, %19 : vector<2x6x6xf32>
    %94 = arith.addf %90, %93 : vector<2x6x6xf32>
    %c10 = arith.constant 10 : index
    %95 = memref.load %arg1[%c10] : memref<81xf32, #tpu.memory_space<smem>>
    %96 = vector.broadcast %95 : f32 to vector<2x6x6xf32>
    %97 = arith.mulf %96, %21 : vector<2x6x6xf32>
    %98 = arith.addf %94, %97 : vector<2x6x6xf32>
    %c11 = arith.constant 11 : index
    %99 = memref.load %arg1[%c11] : memref<81xf32, #tpu.memory_space<smem>>
    %100 = vector.broadcast %99 : f32 to vector<2x6x6xf32>
    %101 = arith.mulf %100, %23 : vector<2x6x6xf32>
    %102 = arith.addf %98, %101 : vector<2x6x6xf32>
    %c12 = arith.constant 12 : index
    %103 = memref.load %arg1[%c12] : memref<81xf32, #tpu.memory_space<smem>>
    %104 = vector.broadcast %103 : f32 to vector<2x6x6xf32>
    %105 = arith.mulf %104, %25 : vector<2x6x6xf32>
    %106 = arith.addf %102, %105 : vector<2x6x6xf32>
    %c13 = arith.constant 13 : index
    %107 = memref.load %arg1[%c13] : memref<81xf32, #tpu.memory_space<smem>>
    %108 = vector.broadcast %107 : f32 to vector<2x6x6xf32>
    %109 = arith.mulf %108, %27 : vector<2x6x6xf32>
    %110 = arith.addf %106, %109 : vector<2x6x6xf32>
    %c14 = arith.constant 14 : index
    %111 = memref.load %arg1[%c14] : memref<81xf32, #tpu.memory_space<smem>>
    %112 = vector.broadcast %111 : f32 to vector<2x6x6xf32>
    %113 = arith.mulf %112, %29 : vector<2x6x6xf32>
    %114 = arith.addf %110, %113 : vector<2x6x6xf32>
    %c15 = arith.constant 15 : index
    %115 = memref.load %arg1[%c15] : memref<81xf32, #tpu.memory_space<smem>>
    %116 = vector.broadcast %115 : f32 to vector<2x6x6xf32>
    %117 = arith.mulf %116, %31 : vector<2x6x6xf32>
    %118 = arith.addf %114, %117 : vector<2x6x6xf32>
    %c16 = arith.constant 16 : index
    %119 = memref.load %arg1[%c16] : memref<81xf32, #tpu.memory_space<smem>>
    %120 = vector.broadcast %119 : f32 to vector<2x6x6xf32>
    %121 = arith.mulf %120, %33 : vector<2x6x6xf32>
    %122 = arith.addf %118, %121 : vector<2x6x6xf32>
    %c17 = arith.constant 17 : index
    %123 = memref.load %arg1[%c17] : memref<81xf32, #tpu.memory_space<smem>>
    %124 = vector.broadcast %123 : f32 to vector<2x6x6xf32>
    %125 = arith.mulf %124, %35 : vector<2x6x6xf32>
    %126 = arith.addf %122, %125 : vector<2x6x6xf32>
    %c18 = arith.constant 18 : index
    %127 = memref.load %arg1[%c18] : memref<81xf32, #tpu.memory_space<smem>>
    %128 = vector.broadcast %127 : f32 to vector<2x6x6xf32>
    %129 = arith.mulf %128, %37 : vector<2x6x6xf32>
    %130 = arith.addf %126, %129 : vector<2x6x6xf32>
    %c19 = arith.constant 19 : index
    %131 = memref.load %arg1[%c19] : memref<81xf32, #tpu.memory_space<smem>>
    %132 = vector.broadcast %131 : f32 to vector<2x6x6xf32>
    %133 = arith.mulf %132, %39 : vector<2x6x6xf32>
    %134 = arith.addf %130, %133 : vector<2x6x6xf32>
    %c20 = arith.constant 20 : index
    %135 = memref.load %arg1[%c20] : memref<81xf32, #tpu.memory_space<smem>>
    %136 = vector.broadcast %135 : f32 to vector<2x6x6xf32>
    %137 = arith.mulf %136, %41 : vector<2x6x6xf32>
    %138 = arith.addf %134, %137 : vector<2x6x6xf32>
    %c21 = arith.constant 21 : index
    %139 = memref.load %arg1[%c21] : memref<81xf32, #tpu.memory_space<smem>>
    %140 = vector.broadcast %139 : f32 to vector<2x6x6xf32>
    %141 = arith.mulf %140, %43 : vector<2x6x6xf32>
    %142 = arith.addf %138, %141 : vector<2x6x6xf32>
    %c22 = arith.constant 22 : index
    %143 = memref.load %arg1[%c22] : memref<81xf32, #tpu.memory_space<smem>>
    %144 = vector.broadcast %143 : f32 to vector<2x6x6xf32>
    %145 = arith.mulf %144, %45 : vector<2x6x6xf32>
    %146 = arith.addf %142, %145 : vector<2x6x6xf32>
    %c23 = arith.constant 23 : index
    %147 = memref.load %arg1[%c23] : memref<81xf32, #tpu.memory_space<smem>>
    %148 = vector.broadcast %147 : f32 to vector<2x6x6xf32>
    %149 = arith.mulf %148, %47 : vector<2x6x6xf32>
    %150 = arith.addf %146, %149 : vector<2x6x6xf32>
    %c24 = arith.constant 24 : index
    %151 = memref.load %arg1[%c24] : memref<81xf32, #tpu.memory_space<smem>>
    %152 = vector.broadcast %151 : f32 to vector<2x6x6xf32>
    %153 = arith.mulf %152, %49 : vector<2x6x6xf32>
    %154 = arith.addf %150, %153 : vector<2x6x6xf32>
    %c25 = arith.constant 25 : index
    %155 = memref.load %arg1[%c25] : memref<81xf32, #tpu.memory_space<smem>>
    %156 = vector.broadcast %155 : f32 to vector<2x6x6xf32>
    %157 = arith.mulf %156, %51 : vector<2x6x6xf32>
    %158 = arith.addf %154, %157 : vector<2x6x6xf32>
    %c26 = arith.constant 26 : index
    %159 = memref.load %arg1[%c26] : memref<81xf32, #tpu.memory_space<smem>>
    %160 = vector.broadcast %159 : f32 to vector<2x6x6xf32>
    %161 = arith.mulf %160, %53 : vector<2x6x6xf32>
    %162 = arith.addf %158, %161 : vector<2x6x6xf32>
    %c0_108 = arith.constant 0 : index
    %163 = memref.load %arg2[%c0_108] : memref<9xf32, #tpu.memory_space<smem>>
    %164 = vector.broadcast %163 : f32 to vector<2x6x6xf32>
    %165 = arith.addf %162, %164 : vector<2x6x6xf32>
    %166 = vector.shape_cast %165 : vector<2x6x6xf32> to vector<1x2x6x6xf32>
    %cst_109 = arith.constant dense<0.000000e+00> : vector<1xf32>
    %167 = vector.multi_reduction <add>, %166, %cst_109 [1, 2, 3] : vector<1x2x6x6xf32> to vector<1xf32>
    %168 = vector.shape_cast %167 : vector<1xf32> to vector<1x1x1x1xf32>
    %169 = vector.extract %168[0, 0, 0, 0] : f32 from vector<1x1x1x1xf32>
    %170 = arith.mulf %165, %165 : vector<2x6x6xf32>
    %171 = vector.shape_cast %170 : vector<2x6x6xf32> to vector<1x2x6x6xf32>
    %cst_110 = arith.constant dense<0.000000e+00> : vector<1xf32>
    %172 = vector.multi_reduction <add>, %171, %cst_110 [1, 2, 3] : vector<1x2x6x6xf32> to vector<1xf32>
    %173 = vector.shape_cast %172 : vector<1xf32> to vector<1x1x1x1xf32>
    %174 = vector.extract %173[0, 0, 0, 0] : f32 from vector<1x1x1x1xf32>
    %cst_111 = arith.constant 0.013888889 : f32
    %175 = arith.mulf %169, %cst_111 : f32
    %cst_112 = arith.constant 0.013888889 : f32
    %176 = arith.mulf %174, %cst_112 : f32
    %177 = arith.mulf %175, %175 : f32
    %178 = arith.subf %176, %177 : f32
    %cst_113 = arith.constant 9.99999974E-6 : f32
    %179 = arith.addf %178, %cst_113 : f32
    %180 = math.rsqrt %179 : f32
    %c3_114 = arith.constant 3 : index
    %181 = memref.load %arg2[%c3_114] : memref<9xf32, #tpu.memory_space<smem>>
    %182 = arith.mulf %180, %181 : f32
    %c6_115 = arith.constant 6 : index
    %183 = memref.load %arg2[%c6_115] : memref<9xf32, #tpu.memory_space<smem>>
    %184 = arith.mulf %175, %182 : f32
    %185 = arith.subf %183, %184 : f32
    %186 = vector.broadcast %182 : f32 to vector<2x6x6xf32>
    %187 = arith.mulf %165, %186 : vector<2x6x6xf32>
    %188 = vector.broadcast %185 : f32 to vector<2x6x6xf32>
    %189 = arith.addf %187, %188 : vector<2x6x6xf32>
    %c0_116 = arith.constant 0 : index
    %c0_117 = arith.constant 0 : index
    %c0_118 = arith.constant 0 : index
    %c0_119 = arith.constant 0 : index
    %190 = vector.load %arg3[%c0_116, %c0_117, %c0_118, %c0_119] : memref<2x3x6x6xf32, #tpu.memory_space<vmem>>, vector<2x1x6x6xf32>
    %191 = vector.shape_cast %190 : vector<2x1x6x6xf32> to vector<2x6x6xf32>
    %192 = vector.shape_cast %189 : vector<2x6x6xf32> to vector<2x1x6x6xf32>
    tpu.vector_store %arg3[%c0_116, %c0_117, %c0_118, %c0_119], %192 {strides = array<i32>} : memref<2x3x6x6xf32, #tpu.memory_space<vmem>>, vector<2x1x6x6xf32>,
    %cst_120 = arith.constant 0.000000e+00 : f32
    %193 = vector.broadcast %cst_120 : f32 to vector<2x6x6xf32>
    %c27 = arith.constant 27 : index
    %194 = memref.load %arg1[%c27] : memref<81xf32, #tpu.memory_space<smem>>
    %195 = vector.broadcast %194 : f32 to vector<2x6x6xf32>
    %196 = arith.mulf %195, %1 : vector<2x6x6xf32>
    %197 = arith.addf %193, %196 : vector<2x6x6xf32>
    %c28 = arith.constant 28 : index
    %198 = memref.load %arg1[%c28] : memref<81xf32, #tpu.memory_space<smem>>
    %199 = vector.broadcast %198 : f32 to vector<2x6x6xf32>
    %200 = arith.mulf %199, %3 : vector<2x6x6xf32>
    %201 = arith.addf %197, %200 : vector<2x6x6xf32>
    %c29 = arith.constant 29 : index
    %202 = memref.load %arg1[%c29] : memref<81xf32, #tpu.memory_space<smem>>
    %203 = vector.broadcast %202 : f32 to vector<2x6x6xf32>
    %204 = arith.mulf %203, %5 : vector<2x6x6xf32>
    %205 = arith.addf %201, %204 : vector<2x6x6xf32>
    %c30 = arith.constant 30 : index
    %206 = memref.load %arg1[%c30] : memref<81xf32, #tpu.memory_space<smem>>
    %207 = vector.broadcast %206 : f32 to vector<2x6x6xf32>
    %208 = arith.mulf %207, %7 : vector<2x6x6xf32>
    %209 = arith.addf %205, %208 : vector<2x6x6xf32>
    %c31 = arith.constant 31 : index
    %210 = memref.load %arg1[%c31] : memref<81xf32, #tpu.memory_space<smem>>
    %211 = vector.broadcast %210 : f32 to vector<2x6x6xf32>
    %212 = arith.mulf %211, %9 : vector<2x6x6xf32>
    %213 = arith.addf %209, %212 : vector<2x6x6xf32>
    %c32 = arith.constant 32 : index
    %214 = memref.load %arg1[%c32] : memref<81xf32, #tpu.memory_space<smem>>
    %215 = vector.broadcast %214 : f32 to vector<2x6x6xf32>
    %216 = arith.mulf %215, %11 : vector<2x6x6xf32>
    %217 = arith.addf %213, %216 : vector<2x6x6xf32>
    %c33 = arith.constant 33 : index
    %218 = memref.load %arg1[%c33] : memref<81xf32, #tpu.memory_space<smem>>
    %219 = vector.broadcast %218 : f32 to vector<2x6x6xf32>
    %220 = arith.mulf %219, %13 : vector<2x6x6xf32>
    %221 = arith.addf %217, %220 : vector<2x6x6xf32>
    %c34 = arith.constant 34 : index
    %222 = memref.load %arg1[%c34] : memref<81xf32, #tpu.memory_space<smem>>
    %223 = vector.broadcast %222 : f32 to vector<2x6x6xf32>
    %224 = arith.mulf %223, %15 : vector<2x6x6xf32>
    %225 = arith.addf %221, %224 : vector<2x6x6xf32>
    %c35 = arith.constant 35 : index
    %226 = memref.load %arg1[%c35] : memref<81xf32, #tpu.memory_space<smem>>
    %227 = vector.broadcast %226 : f32 to vector<2x6x6xf32>
    %228 = arith.mulf %227, %17 : vector<2x6x6xf32>
    %229 = arith.addf %225, %228 : vector<2x6x6xf32>
    %c36 = arith.constant 36 : index
    %230 = memref.load %arg1[%c36] : memref<81xf32, #tpu.memory_space<smem>>
    %231 = vector.broadcast %230 : f32 to vector<2x6x6xf32>
    %232 = arith.mulf %231, %19 : vector<2x6x6xf32>
    %233 = arith.addf %229, %232 : vector<2x6x6xf32>
    %c37 = arith.constant 37 : index
    %234 = memref.load %arg1[%c37] : memref<81xf32, #tpu.memory_space<smem>>
    %235 = vector.broadcast %234 : f32 to vector<2x6x6xf32>
    %236 = arith.mulf %235, %21 : vector<2x6x6xf32>
    %237 = arith.addf %233, %236 : vector<2x6x6xf32>
    %c38 = arith.constant 38 : index
    %238 = memref.load %arg1[%c38] : memref<81xf32, #tpu.memory_space<smem>>
    %239 = vector.broadcast %238 : f32 to vector<2x6x6xf32>
    %240 = arith.mulf %239, %23 : vector<2x6x6xf32>
    %241 = arith.addf %237, %240 : vector<2x6x6xf32>
    %c39 = arith.constant 39 : index
    %242 = memref.load %arg1[%c39] : memref<81xf32, #tpu.memory_space<smem>>
    %243 = vector.broadcast %242 : f32 to vector<2x6x6xf32>
    %244 = arith.mulf %243, %25 : vector<2x6x6xf32>
    %245 = arith.addf %241, %244 : vector<2x6x6xf32>
    %c40 = arith.constant 40 : index
    %246 = memref.load %arg1[%c40] : memref<81xf32, #tpu.memory_space<smem>>
    %247 = vector.broadcast %246 : f32 to vector<2x6x6xf32>
    %248 = arith.mulf %247, %27 : vector<2x6x6xf32>
    %249 = arith.addf %245, %248 : vector<2x6x6xf32>
    %c41 = arith.constant 41 : index
    %250 = memref.load %arg1[%c41] : memref<81xf32, #tpu.memory_space<smem>>
    %251 = vector.broadcast %250 : f32 to vector<2x6x6xf32>
    %252 = arith.mulf %251, %29 : vector<2x6x6xf32>
    %253 = arith.addf %249, %252 : vector<2x6x6xf32>
    %c42 = arith.constant 42 : index
    %254 = memref.load %arg1[%c42] : memref<81xf32, #tpu.memory_space<smem>>
    %255 = vector.broadcast %254 : f32 to vector<2x6x6xf32>
    %256 = arith.mulf %255, %31 : vector<2x6x6xf32>
    %257 = arith.addf %253, %256 : vector<2x6x6xf32>
    %c43 = arith.constant 43 : index
    %258 = memref.load %arg1[%c43] : memref<81xf32, #tpu.memory_space<smem>>
    %259 = vector.broadcast %258 : f32 to vector<2x6x6xf32>
    %260 = arith.mulf %259, %33 : vector<2x6x6xf32>
    %261 = arith.addf %257, %260 : vector<2x6x6xf32>
    %c44 = arith.constant 44 : index
    %262 = memref.load %arg1[%c44] : memref<81xf32, #tpu.memory_space<smem>>
    %263 = vector.broadcast %262 : f32 to vector<2x6x6xf32>
    %264 = arith.mulf %263, %35 : vector<2x6x6xf32>
    %265 = arith.addf %261, %264 : vector<2x6x6xf32>
    %c45 = arith.constant 45 : index
    %266 = memref.load %arg1[%c45] : memref<81xf32, #tpu.memory_space<smem>>
    %267 = vector.broadcast %266 : f32 to vector<2x6x6xf32>
    %268 = arith.mulf %267, %37 : vector<2x6x6xf32>
    %269 = arith.addf %265, %268 : vector<2x6x6xf32>
    %c46 = arith.constant 46 : index
    %270 = memref.load %arg1[%c46] : memref<81xf32, #tpu.memory_space<smem>>
    %271 = vector.broadcast %270 : f32 to vector<2x6x6xf32>
    %272 = arith.mulf %271, %39 : vector<2x6x6xf32>
    %273 = arith.addf %269, %272 : vector<2x6x6xf32>
    %c47 = arith.constant 47 : index
    %274 = memref.load %arg1[%c47] : memref<81xf32, #tpu.memory_space<smem>>
    %275 = vector.broadcast %274 : f32 to vector<2x6x6xf32>
    %276 = arith.mulf %275, %41 : vector<2x6x6xf32>
    %277 = arith.addf %273, %276 : vector<2x6x6xf32>
    %c48 = arith.constant 48 : index
    %278 = memref.load %arg1[%c48] : memref<81xf32, #tpu.memory_space<smem>>
    %279 = vector.broadcast %278 : f32 to vector<2x6x6xf32>
    %280 = arith.mulf %279, %43 : vector<2x6x6xf32>
    %281 = arith.addf %277, %280 : vector<2x6x6xf32>
    %c49 = arith.constant 49 : index
    %282 = memref.load %arg1[%c49] : memref<81xf32, #tpu.memory_space<smem>>
    %283 = vector.broadcast %282 : f32 to vector<2x6x6xf32>
    %284 = arith.mulf %283, %45 : vector<2x6x6xf32>
    %285 = arith.addf %281, %284 : vector<2x6x6xf32>
    %c50 = arith.constant 50 : index
    %286 = memref.load %arg1[%c50] : memref<81xf32, #tpu.memory_space<smem>>
    %287 = vector.broadcast %286 : f32 to vector<2x6x6xf32>
    %288 = arith.mulf %287, %47 : vector<2x6x6xf32>
    %289 = arith.addf %285, %288 : vector<2x6x6xf32>
    %c51 = arith.constant 51 : index
    %290 = memref.load %arg1[%c51] : memref<81xf32, #tpu.memory_space<smem>>
    %291 = vector.broadcast %290 : f32 to vector<2x6x6xf32>
    %292 = arith.mulf %291, %49 : vector<2x6x6xf32>
    %293 = arith.addf %289, %292 : vector<2x6x6xf32>
    %c52 = arith.constant 52 : index
    %294 = memref.load %arg1[%c52] : memref<81xf32, #tpu.memory_space<smem>>
    %295 = vector.broadcast %294 : f32 to vector<2x6x6xf32>
    %296 = arith.mulf %295, %51 : vector<2x6x6xf32>
    %297 = arith.addf %293, %296 : vector<2x6x6xf32>
    %c53 = arith.constant 53 : index
    %298 = memref.load %arg1[%c53] : memref<81xf32, #tpu.memory_space<smem>>
    %299 = vector.broadcast %298 : f32 to vector<2x6x6xf32>
    %300 = arith.mulf %299, %53 : vector<2x6x6xf32>
    %301 = arith.addf %297, %300 : vector<2x6x6xf32>
    %c1_121 = arith.constant 1 : index
    %302 = memref.load %arg2[%c1_121] : memref<9xf32, #tpu.memory_space<smem>>
    %303 = vector.broadcast %302 : f32 to vector<2x6x6xf32>
    %304 = arith.addf %301, %303 : vector<2x6x6xf32>
    %305 = vector.shape_cast %304 : vector<2x6x6xf32> to vector<1x2x6x6xf32>
    %cst_122 = arith.constant dense<0.000000e+00> : vector<1xf32>
    %306 = vector.multi_reduction <add>, %305, %cst_122 [1, 2, 3] : vector<1x2x6x6xf32> to vector<1xf32>
    %307 = vector.shape_cast %306 : vector<1xf32> to vector<1x1x1x1xf32>
    %308 = vector.extract %307[0, 0, 0, 0] : f32 from vector<1x1x1x1xf32>
    %309 = arith.mulf %304, %304 : vector<2x6x6xf32>
    %310 = vector.shape_cast %309 : vector<2x6x6xf32> to vector<1x2x6x6xf32>
    %cst_123 = arith.constant dense<0.000000e+00> : vector<1xf32>
    %311 = vector.multi_reduction <add>, %310, %cst_123 [1, 2, 3] : vector<1x2x6x6xf32> to vector<1xf32>
    %312 = vector.shape_cast %311 : vector<1xf32> to vector<1x1x1x1xf32>
    %313 = vector.extract %312[0, 0, 0, 0] : f32 from vector<1x1x1x1xf32>
    %cst_124 = arith.constant 0.013888889 : f32
    %314 = arith.mulf %308, %cst_124 : f32
    %cst_125 = arith.constant 0.013888889 : f32
    %315 = arith.mulf %313, %cst_125 : f32
    %316 = arith.mulf %314, %314 : f32
    %317 = arith.subf %315, %316 : f32
    %cst_126 = arith.constant 9.99999974E-6 : f32
    %318 = arith.addf %317, %cst_126 : f32
    %319 = math.rsqrt %318 : f32
    %c4_127 = arith.constant 4 : index
    %320 = memref.load %arg2[%c4_127] : memref<9xf32, #tpu.memory_space<smem>>
    %321 = arith.mulf %319, %320 : f32
    %c7_128 = arith.constant 7 : index
    %322 = memref.load %arg2[%c7_128] : memref<9xf32, #tpu.memory_space<smem>>
    %323 = arith.mulf %314, %321 : f32
    %324 = arith.subf %322, %323 : f32
    %325 = vector.broadcast %321 : f32 to vector<2x6x6xf32>
    %326 = arith.mulf %304, %325 : vector<2x6x6xf32>
    %327 = vector.broadcast %324 : f32 to vector<2x6x6xf32>
    %328 = arith.addf %326, %327 : vector<2x6x6xf32>
    %c0_129 = arith.constant 0 : index
    %c1_130 = arith.constant 1 : index
    %c0_131 = arith.constant 0 : index
    %c0_132 = arith.constant 0 : index
    %329 = vector.load %arg3[%c0_129, %c1_130, %c0_131, %c0_132] : memref<2x3x6x6xf32, #tpu.memory_space<vmem>>, vector<2x1x6x6xf32>
    %330 = vector.shape_cast %329 : vector<2x1x6x6xf32> to vector<2x6x6xf32>
    %331 = vector.shape_cast %328 : vector<2x6x6xf32> to vector<2x1x6x6xf32>
    tpu.vector_store %arg3[%c0_129, %c1_130, %c0_131, %c0_132], %331 {strides = array<i32>} : memref<2x3x6x6xf32, #tpu.memory_space<vmem>>, vector<2x1x6x6xf32>,
    %cst_133 = arith.constant 0.000000e+00 : f32
    %332 = vector.broadcast %cst_133 : f32 to vector<2x6x6xf32>
    %c54 = arith.constant 54 : index
    %333 = memref.load %arg1[%c54] : memref<81xf32, #tpu.memory_space<smem>>
    %334 = vector.broadcast %333 : f32 to vector<2x6x6xf32>
    %335 = arith.mulf %334, %1 : vector<2x6x6xf32>
    %336 = arith.addf %332, %335 : vector<2x6x6xf32>
    %c55 = arith.constant 55 : index
    %337 = memref.load %arg1[%c55] : memref<81xf32, #tpu.memory_space<smem>>
    %338 = vector.broadcast %337 : f32 to vector<2x6x6xf32>
    %339 = arith.mulf %338, %3 : vector<2x6x6xf32>
    %340 = arith.addf %336, %339 : vector<2x6x6xf32>
    %c56 = arith.constant 56 : index
    %341 = memref.load %arg1[%c56] : memref<81xf32, #tpu.memory_space<smem>>
    %342 = vector.broadcast %341 : f32 to vector<2x6x6xf32>
    %343 = arith.mulf %342, %5 : vector<2x6x6xf32>
    %344 = arith.addf %340, %343 : vector<2x6x6xf32>
    %c57 = arith.constant 57 : index
    %345 = memref.load %arg1[%c57] : memref<81xf32, #tpu.memory_space<smem>>
    %346 = vector.broadcast %345 : f32 to vector<2x6x6xf32>
    %347 = arith.mulf %346, %7 : vector<2x6x6xf32>
    %348 = arith.addf %344, %347 : vector<2x6x6xf32>
    %c58 = arith.constant 58 : index
    %349 = memref.load %arg1[%c58] : memref<81xf32, #tpu.memory_space<smem>>
    %350 = vector.broadcast %349 : f32 to vector<2x6x6xf32>
    %351 = arith.mulf %350, %9 : vector<2x6x6xf32>
    %352 = arith.addf %348, %351 : vector<2x6x6xf32>
    %c59 = arith.constant 59 : index
    %353 = memref.load %arg1[%c59] : memref<81xf32, #tpu.memory_space<smem>>
    %354 = vector.broadcast %353 : f32 to vector<2x6x6xf32>
    %355 = arith.mulf %354, %11 : vector<2x6x6xf32>
    %356 = arith.addf %352, %355 : vector<2x6x6xf32>
    %c60 = arith.constant 60 : index
    %357 = memref.load %arg1[%c60] : memref<81xf32, #tpu.memory_space<smem>>
    %358 = vector.broadcast %357 : f32 to vector<2x6x6xf32>
    %359 = arith.mulf %358, %13 : vector<2x6x6xf32>
    %360 = arith.addf %356, %359 : vector<2x6x6xf32>
    %c61 = arith.constant 61 : index
    %361 = memref.load %arg1[%c61] : memref<81xf32, #tpu.memory_space<smem>>
    %362 = vector.broadcast %361 : f32 to vector<2x6x6xf32>
    %363 = arith.mulf %362, %15 : vector<2x6x6xf32>
    %364 = arith.addf %360, %363 : vector<2x6x6xf32>
    %c62 = arith.constant 62 : index
    %365 = memref.load %arg1[%c62] : memref<81xf32, #tpu.memory_space<smem>>
    %366 = vector.broadcast %365 : f32 to vector<2x6x6xf32>
    %367 = arith.mulf %366, %17 : vector<2x6x6xf32>
    %368 = arith.addf %364, %367 : vector<2x6x6xf32>
    %c63 = arith.constant 63 : index
    %369 = memref.load %arg1[%c63] : memref<81xf32, #tpu.memory_space<smem>>
    %370 = vector.broadcast %369 : f32 to vector<2x6x6xf32>
    %371 = arith.mulf %370, %19 : vector<2x6x6xf32>
    %372 = arith.addf %368, %371 : vector<2x6x6xf32>
    %c64 = arith.constant 64 : index
    %373 = memref.load %arg1[%c64] : memref<81xf32, #tpu.memory_space<smem>>
    %374 = vector.broadcast %373 : f32 to vector<2x6x6xf32>
    %375 = arith.mulf %374, %21 : vector<2x6x6xf32>
    %376 = arith.addf %372, %375 : vector<2x6x6xf32>
    %c65 = arith.constant 65 : index
    %377 = memref.load %arg1[%c65] : memref<81xf32, #tpu.memory_space<smem>>
    %378 = vector.broadcast %377 : f32 to vector<2x6x6xf32>
    %379 = arith.mulf %378, %23 : vector<2x6x6xf32>
    %380 = arith.addf %376, %379 : vector<2x6x6xf32>
    %c66 = arith.constant 66 : index
    %381 = memref.load %arg1[%c66] : memref<81xf32, #tpu.memory_space<smem>>
    %382 = vector.broadcast %381 : f32 to vector<2x6x6xf32>
    %383 = arith.mulf %382, %25 : vector<2x6x6xf32>
    %384 = arith.addf %380, %383 : vector<2x6x6xf32>
    %c67 = arith.constant 67 : index
    %385 = memref.load %arg1[%c67] : memref<81xf32, #tpu.memory_space<smem>>
    %386 = vector.broadcast %385 : f32 to vector<2x6x6xf32>
    %387 = arith.mulf %386, %27 : vector<2x6x6xf32>
    %388 = arith.addf %384, %387 : vector<2x6x6xf32>
    %c68 = arith.constant 68 : index
    %389 = memref.load %arg1[%c68] : memref<81xf32, #tpu.memory_space<smem>>
    %390 = vector.broadcast %389 : f32 to vector<2x6x6xf32>
    %391 = arith.mulf %390, %29 : vector<2x6x6xf32>
    %392 = arith.addf %388, %391 : vector<2x6x6xf32>
    %c69 = arith.constant 69 : index
    %393 = memref.load %arg1[%c69] : memref<81xf32, #tpu.memory_space<smem>>
    %394 = vector.broadcast %393 : f32 to vector<2x6x6xf32>
    %395 = arith.mulf %394, %31 : vector<2x6x6xf32>
    %396 = arith.addf %392, %395 : vector<2x6x6xf32>
    %c70 = arith.constant 70 : index
    %397 = memref.load %arg1[%c70] : memref<81xf32, #tpu.memory_space<smem>>
    %398 = vector.broadcast %397 : f32 to vector<2x6x6xf32>
    %399 = arith.mulf %398, %33 : vector<2x6x6xf32>
    %400 = arith.addf %396, %399 : vector<2x6x6xf32>
    %c71 = arith.constant 71 : index
    %401 = memref.load %arg1[%c71] : memref<81xf32, #tpu.memory_space<smem>>
    %402 = vector.broadcast %401 : f32 to vector<2x6x6xf32>
    %403 = arith.mulf %402, %35 : vector<2x6x6xf32>
    %404 = arith.addf %400, %403 : vector<2x6x6xf32>
    %c72 = arith.constant 72 : index
    %405 = memref.load %arg1[%c72] : memref<81xf32, #tpu.memory_space<smem>>
    %406 = vector.broadcast %405 : f32 to vector<2x6x6xf32>
    %407 = arith.mulf %406, %37 : vector<2x6x6xf32>
    %408 = arith.addf %404, %407 : vector<2x6x6xf32>
    %c73 = arith.constant 73 : index
    %409 = memref.load %arg1[%c73] : memref<81xf32, #tpu.memory_space<smem>>
    %410 = vector.broadcast %409 : f32 to vector<2x6x6xf32>
    %411 = arith.mulf %410, %39 : vector<2x6x6xf32>
    %412 = arith.addf %408, %411 : vector<2x6x6xf32>
    %c74 = arith.constant 74 : index
    %413 = memref.load %arg1[%c74] : memref<81xf32, #tpu.memory_space<smem>>
    %414 = vector.broadcast %413 : f32 to vector<2x6x6xf32>
    %415 = arith.mulf %414, %41 : vector<2x6x6xf32>
    %416 = arith.addf %412, %415 : vector<2x6x6xf32>
    %c75 = arith.constant 75 : index
    %417 = memref.load %arg1[%c75] : memref<81xf32, #tpu.memory_space<smem>>
    %418 = vector.broadcast %417 : f32 to vector<2x6x6xf32>
    %419 = arith.mulf %418, %43 : vector<2x6x6xf32>
    %420 = arith.addf %416, %419 : vector<2x6x6xf32>
    %c76 = arith.constant 76 : index
    %421 = memref.load %arg1[%c76] : memref<81xf32, #tpu.memory_space<smem>>
    %422 = vector.broadcast %421 : f32 to vector<2x6x6xf32>
    %423 = arith.mulf %422, %45 : vector<2x6x6xf32>
    %424 = arith.addf %420, %423 : vector<2x6x6xf32>
    %c77 = arith.constant 77 : index
    %425 = memref.load %arg1[%c77] : memref<81xf32, #tpu.memory_space<smem>>
    %426 = vector.broadcast %425 : f32 to vector<2x6x6xf32>
    %427 = arith.mulf %426, %47 : vector<2x6x6xf32>
    %428 = arith.addf %424, %427 : vector<2x6x6xf32>
    %c78 = arith.constant 78 : index
    %429 = memref.load %arg1[%c78] : memref<81xf32, #tpu.memory_space<smem>>
    %430 = vector.broadcast %429 : f32 to vector<2x6x6xf32>
    %431 = arith.mulf %430, %49 : vector<2x6x6xf32>
    %432 = arith.addf %428, %431 : vector<2x6x6xf32>
    %c79 = arith.constant 79 : index
    %433 = memref.load %arg1[%c79] : memref<81xf32, #tpu.memory_space<smem>>
    %434 = vector.broadcast %433 : f32 to vector<2x6x6xf32>
    %435 = arith.mulf %434, %51 : vector<2x6x6xf32>
    %436 = arith.addf %432, %435 : vector<2x6x6xf32>
    %c80 = arith.constant 80 : index
    %437 = memref.load %arg1[%c80] : memref<81xf32, #tpu.memory_space<smem>>
    %438 = vector.broadcast %437 : f32 to vector<2x6x6xf32>
    %439 = arith.mulf %438, %53 : vector<2x6x6xf32>
    %440 = arith.addf %436, %439 : vector<2x6x6xf32>
    %c2_134 = arith.constant 2 : index
    %441 = memref.load %arg2[%c2_134] : memref<9xf32, #tpu.memory_space<smem>>
    %442 = vector.broadcast %441 : f32 to vector<2x6x6xf32>
    %443 = arith.addf %440, %442 : vector<2x6x6xf32>
    %444 = vector.shape_cast %443 : vector<2x6x6xf32> to vector<1x2x6x6xf32>
    %cst_135 = arith.constant dense<0.000000e+00> : vector<1xf32>
    %445 = vector.multi_reduction <add>, %444, %cst_135 [1, 2, 3] : vector<1x2x6x6xf32> to vector<1xf32>
    %446 = vector.shape_cast %445 : vector<1xf32> to vector<1x1x1x1xf32>
    %447 = vector.extract %446[0, 0, 0, 0] : f32 from vector<1x1x1x1xf32>
    %448 = arith.mulf %443, %443 : vector<2x6x6xf32>
    %449 = vector.shape_cast %448 : vector<2x6x6xf32> to vector<1x2x6x6xf32>
    %cst_136 = arith.constant dense<0.000000e+00> : vector<1xf32>
    %450 = vector.multi_reduction <add>, %449, %cst_136 [1, 2, 3] : vector<1x2x6x6xf32> to vector<1xf32>
    %451 = vector.shape_cast %450 : vector<1xf32> to vector<1x1x1x1xf32>
    %452 = vector.extract %451[0, 0, 0, 0] : f32 from vector<1x1x1x1xf32>
    %cst_137 = arith.constant 0.013888889 : f32
    %453 = arith.mulf %447, %cst_137 : f32
    %cst_138 = arith.constant 0.013888889 : f32
    %454 = arith.mulf %452, %cst_138 : f32
    %455 = arith.mulf %453, %453 : f32
    %456 = arith.subf %454, %455 : f32
    %cst_139 = arith.constant 9.99999974E-6 : f32
    %457 = arith.addf %456, %cst_139 : f32
    %458 = math.rsqrt %457 : f32
    %c5_140 = arith.constant 5 : index
    %459 = memref.load %arg2[%c5_140] : memref<9xf32, #tpu.memory_space<smem>>
    %460 = arith.mulf %458, %459 : f32
    %c8_141 = arith.constant 8 : index
    %461 = memref.load %arg2[%c8_141] : memref<9xf32, #tpu.memory_space<smem>>
    %462 = arith.mulf %453, %460 : f32
    %463 = arith.subf %461, %462 : f32
    %464 = vector.broadcast %460 : f32 to vector<2x6x6xf32>
    %465 = arith.mulf %443, %464 : vector<2x6x6xf32>
    %466 = vector.broadcast %463 : f32 to vector<2x6x6xf32>
    %467 = arith.addf %465, %466 : vector<2x6x6xf32>
    %c0_142 = arith.constant 0 : index
    %c2_143 = arith.constant 2 : index
    %c0_144 = arith.constant 0 : index
    %c0_145 = arith.constant 0 : index
    %468 = vector.load %arg3[%c0_142, %c2_143, %c0_144, %c0_145] : memref<2x3x6x6xf32, #tpu.memory_space<vmem>>, vector<2x1x6x6xf32>
    %469 = vector.shape_cast %468 : vector<2x1x6x6xf32> to vector<2x6x6xf32>
    %470 = vector.shape_cast %467 : vector<2x6x6xf32> to vector<2x1x6x6xf32>
    tpu.vector_store %arg3[%c0_142, %c2_143, %c0_144, %c0_145], %470 {strides = array<i32>} : memref<2x3x6x6xf32, #tpu.memory_space<vmem>>, vector<2x1x6x6xf32>,
    return
  }
}

</mosaic_0001>

<llo_original>
// kernel: tpu_custom_call.1
$region0: #{tpu_custom_call.1}
  #allocation0 [shape = 'u32[]', space=smem, size = 0x4, offset = 0x4, fixed_abs, tag = 'smem constant byte address 0x4 - core index']
  #allocation1 [shape = 'u32[72,128]{1,0:T(1,128)}', space=vmem, size = 0x9000, scoped, tag = 'internal scratch']
  %s0 = inlined_call_operand.hbm [shape: f32[2,3,8,8], index: 0, kind: input, shape index: {}]
  %s1 = inlined_call_operand.hbm [shape: f32[81], index: 1, kind: input, shape index: {}]
  %s2 = inlined_call_operand.vmem [shape: f32[9], index: 2, kind: input, shape index: {}]
  %s3 = inlined_call_operand.vmem [shape: f32[2,3,6,6], index: 3, kind: output, shape index: {}]
  %s4 = sld [smem:[#allocation0]]
  $region34: #{tpu_custom_call.1} parent=0
    _
  %s6 = ssub.s32 1, %s4
  %s7 = scalar_select 0, %s6, %s4
  $region1: #{tpu_custom_call.1} parent=0
    #allocation2 [shape = 'u8[24576]{0}', space=vmem, size = 0x6000, scoped, tag = 'input window, operand 0, single buffered']
    #allocation3 [shape = 's32[1]{0}', space=sflag, size = 0x4, scoped, tag = 'scoped memory for tpu_custom_call.1']
    #allocation4 [shape = 's32[1]{0}', space=sflag, size = 0x4, scoped, tag = 'scoped memory for tpu_custom_call.1']
    #allocation5 [shape = 's32[1]{0}', space=sflag, size = 0x4, scoped, tag = 'scoped memory for tpu_custom_call.1']
    #allocation6 [shape = 'u8[512]{0}', space=smem, size = 0x200, scoped, tag = 'input window, operand 1, single buffered']
    #allocation7 [shape = 'u8[512]{0}', space=smem, size = 0x200, scoped, tag = 'input window, operand 2, single buffered']
    %8 = vsyncpa [#allocation3], 0
    %9 = vsyncpa [#allocation4], 0
    %10 = vsyncpa [#allocation5], 0
    // Predicated region
    $region2: #{tpu_custom_call.1} parent=1 // pred_check
      _
    $region3: #{tpu_custom_call.1} parent=1 // pred_check_branch
      %12 = sbr.rel (0) target = $region5
    $region4: #{tpu_custom_call.1} parent=1 // pred_region
      %14 = vsyncadd [#allocation3], 0
      %s15 = sshll.u32 %s0, 4
      %s16 = int_to_ptr.hbm [resolvable:$true] %s15
      %s17 = sshll.u32 [#allocation2], 4
      %s18 = int_to_ptr.vmem [resolvable:$true] %s17
      %23 = dma.hbm_to_vmem [thread:$0]  %s16, 768, %s18, [#allocation3], 128, 128, 8
    $region5: #{tpu_custom_call.1} parent=1 // pred_fallthru
      _
    // Predicated region
    $region6: #{tpu_custom_call.1} parent=1 // pred_check
      _
    $region7: #{tpu_custom_call.1} parent=1 // pred_check_branch
      %25 = sbr.rel (0) target = $region9
    $region8: #{tpu_custom_call.1} parent=1 // pred_region
      %27 = vsyncadd [#allocation4], 0
      %s29 = sshll.u32 %s1, 4
      %s30 = int_to_ptr.hbm [resolvable:$true] %s29
      %32 = dma.hbm_to_smem %s30, 16, [#allocation6], [#allocation4]
    $region9: #{tpu_custom_call.1} parent=1 // pred_fallthru
      _
    // Predicated region
    $region10: #{tpu_custom_call.1} parent=1 // pred_check
      _
    $region11: #{tpu_custom_call.1} parent=1 // pred_check_branch
      %34 = sbr.rel (0) target = $region13
    $region12: #{tpu_custom_call.1} parent=1 // pred_region
      %36 = vsyncadd [#allocation5], 0
      %s38 = sshll.u32 %s2, 4
      %s39 = int_to_ptr.vmem [resolvable:$true] %s38
      %41 = dma.vmem_to_smem %s39, 16, [#allocation7], [#allocation5]
    $region13: #{tpu_custom_call.1} parent=1 // pred_fallthru
      _
    // Predicated region
    $region14: #{tpu_custom_call.1} parent=1 // pred_check
      _
    $region15: #{tpu_custom_call.1} parent=1 // pred_check_branch
      %43 = sbr.rel (0) target = $region17
    $region16: #{tpu_custom_call.1} parent=1 // pred_region
      %45 = dma.done [#allocation3], 768
    $region17: #{tpu_custom_call.1} parent=1 // pred_fallthru
      _
    // Predicated region
    $region18: #{tpu_custom_call.1} parent=1 // pred_check
      _
    $region19: #{tpu_custom_call.1} parent=1 // pred_check_branch
      %47 = sbr.rel (0) target = $region21
    $region20: #{tpu_custom_call.1} parent=1 // pred_region
      %49 = dma.done [#allocation4], 16
    $region21: #{tpu_custom_call.1} parent=1 // pred_fallthru
      _
    // Predicated region
    $region22: #{tpu_custom_call.1} parent=1 // pred_check
      _
    $region23: #{tpu_custom_call.1} parent=1 // pred_check_branch
      %51 = sbr.rel (0) target = $region25
    $region24: #{tpu_custom_call.1} parent=1 // pred_region
      %53 = dma.done [#allocation5], 16
    $region25: #{tpu_custom_call.1} parent=1 // pred_fallthru
      _
    %54 = sfence
    %v55 = vld [vmem:[#allocation2] sm:$0x3f]
    %v56 = vld [vmem:[#allocation2 + $0x18] sm:$0x3f]
    %v57 = vld [vmem:[#allocation2 + $0x1] sm:$0x3f]
    %v58 = vld [vmem:[#allocation2 + $0x19] sm:$0x3f]
    %v59 = vld [vmem:[#allocation2 + $0x2] sm:$0x3f]
    %v60 = vld [vmem:[#allocation2 + $0x1a] sm:$0x3f]
    %s61 = scalar_lea.vmem [#allocation2], 8
    %v62 = vld [vmem:[%s61] sm:$0x3f]
    %v63 = vld [vmem:[%s61 + $0x18] sm:$0x3f]
    %v64 = vld [vmem:[%s61 + $0x1] sm:$0x3f]
    %v65 = vld [vmem:[%s61 + $0x19] sm:$0x3f]
    %v66 = vld [vmem:[%s61 + $0x2] sm:$0x3f]
    %v67 = vld [vmem:[%s61 + $0x1a] sm:$0x3f]
    %s68 = scalar_lea.vmem [#allocation2], 16
    %v69 = vld [vmem:[%s68] sm:$0x3f]
    %v70 = vld [vmem:[%s68 + $0x18] sm:$0x3f]
    %v71 = vld [vmem:[%s68 + $0x1] sm:$0x3f]
    %v72 = vld [vmem:[%s68 + $0x19] sm:$0x3f]
    %v73 = vld [vmem:[%s68 + $0x2] sm:$0x3f]
    %v74 = vld [vmem:[%s68 + $0x1a] sm:$0x3f]
    %s75 = sld [smem:[#allocation6]]
    %v76 = vstv %s75
    %v77 = vmul.f32 %v76, %v55
    %v78 = vmul.f32 %v76, %v56
    %v79 = vadd.f32 %v77, 0.0
    %v80 = vadd.f32 %v78, 0.0
    %s81 = sld [smem:[#allocation6 + $0x1]]
    %v82 = vstv %s81
    %v83 = vmul.f32 %v82, %v55
    %v84 = vmul.f32 %v82, %v56
    %87 = vrot.lane.b32.xlu0 %v83, 127
    %v88 = vpop.permute.xlu0 %87
    %89 = vrot.lane.b32.xlu0 %v84, 127
    %v90 = vpop.permute.xlu0 %89
    %v93 = vadd.f32 %v79, %v88
    %v94 = vadd.f32 %v80, %v90
    %s95 = sld [smem:[#allocation6 + $0x2]]
    %v96 = vstv %s95
    %v97 = vmul.f32 %v96, %v55
    %v98 = vmul.f32 %v96, %v56
    %101 = vrot.lane.b32.xlu0 %v97, 126
    %v102 = vpop.permute.xlu0 %101
    %103 = vrot.lane.b32.xlu0 %v98, 126
    %v104 = vpop.permute.xlu0 %103
    %v107 = vadd.f32 %v93, %v102
    %v108 = vadd.f32 %v94, %v104
    %s109 = sld [smem:[#allocation6 + $0x3]]
    %v110 = vstv %s109
    %v111 = vmul.f32 %v110, %v57
    %v112 = vmul.f32 %v110, %v58
    %v113 = vadd.f32 %v107, %v111
    %v114 = vadd.f32 %v108, %v112
    %s115 = sld [smem:[#allocation6 + $0x4]]
    %v116 = vstv %s115
    %v117 = vmul.f32 %v116, %v57
    %v118 = vmul.f32 %v116, %v58
    %121 = vrot.lane.b32.xlu0 %v117, 127
    %v122 = vpop.permute.xlu0 %121
    %123 = vrot.lane.b32.xlu0 %v118, 127
    %v124 = vpop.permute.xlu0 %123
    %v127 = vadd.f32 %v113, %v122
    %v128 = vadd.f32 %v114, %v124
    %s129 = sld [smem:[#allocation6 + $0x5]]
    %v130 = vstv %s129
    %v131 = vmul.f32 %v130, %v57
    %v132 = vmul.f32 %v130, %v58
    %135 = vrot.lane.b32.xlu0 %v131, 126
    %v136 = vpop.permute.xlu0 %135
    %137 = vrot.lane.b32.xlu0 %v132, 126
    %v138 = vpop.permute.xlu0 %137
    %v141 = vadd.f32 %v127, %v136
    %v142 = vadd.f32 %v128, %v138
    %s143 = sld [smem:[#allocation6 + $0x6]]
    %v144 = vstv %s143
    %v145 = vmul.f32 %v144, %v59
    %v146 = vmul.f32 %v144, %v60
    %v147 = vadd.f32 %v141, %v145
    %v148 = vadd.f32 %v142, %v146
    %s149 = sld [smem:[#allocation6 + $0x7]]
    %v150 = vstv %s149
    %v151 = vmul.f32 %v150, %v59
    %v152 = vmul.f32 %v150, %v60
    %155 = vrot.lane.b32.xlu0 %v151, 127
    %v156 = vpop.permute.xlu0 %155
    %157 = vrot.lane.b32.xlu0 %v152, 127
    %v158 = vpop.permute.xlu0 %157
    %v161 = vadd.f32 %v147, %v156
    %v162 = vadd.f32 %v148, %v158
    %s163 = sld [smem:[#allocation6 + $0x8]]
    %v164 = vstv %s163
    %v165 = vmul.f32 %v164, %v59
    %v166 = vmul.f32 %v164, %v60
    %169 = vrot.lane.b32.xlu0 %v165, 126
    %v170 = vpop.permute.xlu0 %169
    %171 = vrot.lane.b32.xlu0 %v166, 126
    %v172 = vpop.permute.xlu0 %171
    %v175 = vadd.f32 %v161, %v170
    %v176 = vadd.f32 %v162, %v172
    %s177 = sld [smem:[#allocation6 + $0x9]]
    %v178 = vstv %s177
    %v179 = vmul.f32 %v178, %v62
    %v180 = vmul.f32 %v178, %v63
    %v181 = vadd.f32 %v175, %v179
    %v182 = vadd.f32 %v176, %v180
    %s183 = sld [smem:[#allocation6 + $0xa]]
    %v184 = vstv %s183
    %v185 = vmul.f32 %v184, %v62
    %v186 = vmul.f32 %v184, %v63
    %189 = vrot.lane.b32.xlu0 %v185, 127
    %v190 = vpop.permute.xlu0 %189
    %191 = vrot.lane.b32.xlu0 %v186, 127
    %v192 = vpop.permute.xlu0 %191
    %v195 = vadd.f32 %v181, %v190
    %v196 = vadd.f32 %v182, %v192
    %s197 = sld [smem:[#allocation6 + $0xb]]
    %v198 = vstv %s197
    %v199 = vmul.f32 %v198, %v62
    %v200 = vmul.f32 %v198, %v63
    %203 = vrot.lane.b32.xlu0 %v199, 126
    %v204 = vpop.permute.xlu0 %203
    %205 = vrot.lane.b32.xlu0 %v200, 126
    %v206 = vpop.permute.xlu0 %205
    %v209 = vadd.f32 %v195, %v204
    %v210 = vadd.f32 %v196, %v206
    %s211 = sld [smem:[#allocation6 + $0xc]]
    %v212 = vstv %s211
    %v213 = vmul.f32 %v212, %v64
    %v214 = vmul.f32 %v212, %v65
    %v215 = vadd.f32 %v209, %v213
    %v216 = vadd.f32 %v210, %v214
    %s217 = sld [smem:[#allocation6 + $0xd]]
    %v218 = vstv %s217
    %v219 = vmul.f32 %v218, %v64
    %v220 = vmul.f32 %v218, %v65
    %223 = vrot.lane.b32.xlu0 %v219, 127
    %v224 = vpop.permute.xlu0 %223
    %225 = vrot.lane.b32.xlu0 %v220, 127
    %v226 = vpop.permute.xlu0 %225
    %v229 = vadd.f32 %v215, %v224
    %v230 = vadd.f32 %v216, %v226
    %s231 = sld [smem:[#allocation6 + $0xe]]
    %v232 = vstv %s231
    %v233 = vmul.f32 %v232, %v64
    %v234 = vmul.f32 %v232, %v65
    %237 = vrot.lane.b32.xlu0 %v233, 126
    %v238 = vpop.permute.xlu0 %237
    %239 = vrot.lane.b32.xlu0 %v234, 126
    %v240 = vpop.permute.xlu0 %239
    %v243 = vadd.f32 %v229, %v238
    %v244 = vadd.f32 %v230, %v240
    %s245 = sld [smem:[#allocation6 + $0xf]]
    %v246 = vstv %s245
    %v247 = vmul.f32 %v246, %v66
    %v248 = vmul.f32 %v246, %v67
    %v249 = vadd.f32 %v243, %v247
    %v250 = vadd.f32 %v244, %v248
    %s251 = sld [smem:[#allocation6 + $0x10]]
    %v252 = vstv %s251
    %v253 = vmul.f32 %v252, %v66
    %v254 = vmul.f32 %v252, %v67
    %257 = vrot.lane.b32.xlu0 %v253, 127
    %v258 = vpop.permute.xlu0 %257
    %259 = vrot.lane.b32.xlu0 %v254, 127
    %v260 = vpop.permute.xlu0 %259
    %v263 = vadd.f32 %v249, %v258
    %v264 = vadd.f32 %v250, %v260
    %s265 = sld [smem:[#allocation6 + $0x11]]
    %v266 = vstv %s265
    %v267 = vmul.f32 %v266, %v66
    %v268 = vmul.f32 %v266, %v67
    %271 = vrot.lane.b32.xlu0 %v267, 126
    %v272 = vpop.permute.xlu0 %271
    %273 = vrot.lane.b32.xlu0 %v268, 126
    %v274 = vpop.permute.xlu0 %273
    %v277 = vadd.f32 %v263, %v272
    %v278 = vadd.f32 %v264, %v274
    %s279 = sld [smem:[#allocation6 + $0x12]]
    %v280 = vstv %s279
    %v281 = vmul.f32 %v280, %v69
    %v282 = vmul.f32 %v280, %v70
    %v283 = vadd.f32 %v277, %v281
    %v284 = vadd.f32 %v278, %v282
    %s285 = sld [smem:[#allocation6 + $0x13]]
    %v286 = vstv %s285
    %v287 = vmul.f32 %v286, %v69
    %v288 = vmul.f32 %v286, %v70
    %291 = vrot.lane.b32.xlu0 %v287, 127
    %v292 = vpop.permute.xlu0 %291
    %293 = vrot.lane.b32.xlu0 %v288, 127
    %v294 = vpop.permute.xlu0 %293
    %v297 = vadd.f32 %v283, %v292
    %v298 = vadd.f32 %v284, %v294
    %s299 = sld [smem:[#allocation6 + $0x14]]
    %v300 = vstv %s299
    %v301 = vmul.f32 %v300, %v69
    %v302 = vmul.f32 %v300, %v70
    %305 = vrot.lane.b32.xlu0 %v301, 126
    %v306 = vpop.permute.xlu0 %305
    %307 = vrot.lane.b32.xlu0 %v302, 126
    %v308 = vpop.permute.xlu0 %307
    %v311 = vadd.f32 %v297, %v306
    %v312 = vadd.f32 %v298, %v308
    %s313 = sld [smem:[#allocation6 + $0x15]]
    %v314 = vstv %s313
    %v315 = vmul.f32 %v314, %v71
    %v316 = vmul.f32 %v314, %v72
    %v317 = vadd.f32 %v311, %v315
    %v318 = vadd.f32 %v312, %v316
    %s319 = sld [smem:[#allocation6 + $0x16]]
    %v320 = vstv %s319
    %v321 = vmul.f32 %v320, %v71
    %v322 = vmul.f32 %v320, %v72
    %325 = vrot.lane.b32.xlu0 %v321, 127
    %v326 = vpop.permute.xlu0 %325
    %327 = vrot.lane.b32.xlu0 %v322, 127
    %v328 = vpop.permute.xlu0 %327
    %v331 = vadd.f32 %v317, %v326
    %v332 = vadd.f32 %v318, %v328
    %s333 = sld [smem:[#allocation6 + $0x17]]
    %v334 = vstv %s333
    %v335 = vmul.f32 %v334, %v71
    %v336 = vmul.f32 %v334, %v72
    %339 = vrot.lane.b32.xlu0 %v335, 126
    %v340 = vpop.permute.xlu0 %339
    %341 = vrot.lane.b32.xlu0 %v336, 126
    %v342 = vpop.permute.xlu0 %341
    %v345 = vadd.f32 %v331, %v340
    %v346 = vadd.f32 %v332, %v342
    %s347 = sld [smem:[#allocation6 + $0x18]]
    %v348 = vstv %s347
    %v349 = vmul.f32 %v348, %v73
    %v350 = vmul.f32 %v348, %v74
    %v351 = vadd.f32 %v345, %v349
    %v352 = vadd.f32 %v346, %v350
    %s353 = sld [smem:[#allocation6 + $0x19]]
    %v354 = vstv %s353
    %v355 = vmul.f32 %v354, %v73
    %v356 = vmul.f32 %v354, %v74
    %359 = vrot.lane.b32.xlu0 %v355, 127
    %v360 = vpop.permute.xlu0 %359
    %361 = vrot.lane.b32.xlu0 %v356, 127
    %v362 = vpop.permute.xlu0 %361
    %v365 = vadd.f32 %v351, %v360
    %v366 = vadd.f32 %v352, %v362
    %s367 = sld [smem:[#allocation6 + $0x1a]]
    %v368 = vstv %s367
    %v369 = vmul.f32 %v368, %v73
    %v370 = vmul.f32 %v368, %v74
    %373 = vrot.lane.b32.xlu0 %v369, 126
    %v374 = vpop.permute.xlu0 %373
    %375 = vrot.lane.b32.xlu0 %v370, 126
    %v376 = vpop.permute.xlu0 %375
    %v379 = vadd.f32 %v365, %v374
    %v380 = vadd.f32 %v366, %v376
    %s381 = sld [smem:[#allocation7]]
    %v382 = vstv %s381
    %v383 = vadd.f32 %v379, %v382
    %v384 = vadd.f32 %v380, %v382
    %vm385 = vcmask 46080
    %v386 = vsel %vm385, %v383, 0.0
    %v387 = vsel %vm385, %v384, 0.0
    %v388 = vadd.f32 %v386, %v387
    %389 = vadd.xlane.f32.xlu0 %v388
    %v390 = vpop.xlane.xlu0 %389
    %v391 = vrot.slane %v390, 4
    %v392 = vadd.f32 %v390, %v391
    %v393 = vrot.slane %v392, 2
    %v394 = vadd.f32 %v392, %v393
    %v395 = vrot.slane %v394, 1
    %v396 = vadd.f32 %v394, %v395
    %s397 = vtos %v396
    %v398 = vmul.f32 %v383, %v383
    %v399 = vmul.f32 %v384, %v384
    %v400 = vsel %vm385, %v398, 0.0
    %v401 = vsel %vm385, %v399, 0.0
    %v402 = vadd.f32 %v400, %v401
    %403 = vadd.xlane.f32.xlu0 %v402
    %v404 = vpop.xlane.xlu0 %403
    %v405 = vrot.slane %v404, 4
    %v406 = vadd.f32 %v404, %v405
    %v407 = vrot.slane %v406, 2
    %v408 = vadd.f32 %v406, %v407
    %v409 = vrot.slane %v408, 1
    %v410 = vadd.f32 %v408, %v409
    %s411 = vtos %v410
    %s412 = smul.f32 %s397, 0.013888889
    %s413 = smul.f32 %s411, 0.013888889
    %s414 = smul.f32 %s412, %s412
    %s415 = ssub.f32 %s413, %s414
    %s416 = sadd.f32 %s415, 1e-05
    %v417 = vstv %s416
    %v418 = vrsqrt.pop %v417
    %v419 = vmul.f32 %v418, %v417
    %v420 = vmul.f32 %v419, %v418
    %v421 = vmul.f32 0.5, %v420
    %v422 = vsub.f32 1.5, %v421
    %v423 = vmul.f32 %v418, %v422
    %vm424 = vweird.f32 %v417
    %vm425 = vweird.f32 %v418
    %vm426 = vmor %vm424, %vm425
    %v427 = vsel %vm426, %v418, %v423
    %s428 = vtos %v427
    %s429 = sld [smem:[#allocation7 + $0x3]]
    %s430 = smul.f32 %s428, %s429
    %s431 = sld [smem:[#allocation7 + $0x6]]
    %s432 = smul.f32 %s412, %s430
    %s433 = ssub.f32 %s431, %s432
    %v434 = vstv %s430
    %v435 = vmul.f32 %v383, %v434
    %v436 = vmul.f32 %v384, %v434
    %v437 = vstv %s433
    %v438 = vadd.f32 %v435, %v437
    %v439 = vadd.f32 %v436, %v437
    %440 = vst.msk [vmem:[%s3] sm:$0x3f] %vm385, %v438
    %441 = vst.msk [vmem:[%s3 + $0x18] sm:$0x3f] %vm385, %v439
    %s442 = sld [smem:[#allocation6 + $0x1b]]
    %v443 = vstv %s442
    %v444 = vmul.f32 %v443, %v55
    %v445 = vmul.f32 %v443, %v56
    %v446 = vadd.f32 %v444, 0.0
    %v447 = vadd.f32 %v445, 0.0
    %s448 = sld [smem:[#allocation6 + $0x1c]]
    %v449 = vstv %s448
    %v450 = vmul.f32 %v449, %v55
    %v451 = vmul.f32 %v449, %v56
    %454 = vrot.lane.b32.xlu0 %v450, 127
    %v455 = vpop.permute.xlu0 %454
    %456 = vrot.lane.b32.xlu0 %v451, 127
    %v457 = vpop.permute.xlu0 %456
    %v460 = vadd.f32 %v446, %v455
    %v461 = vadd.f32 %v447, %v457
    %s462 = sld [smem:[#allocation6 + $0x1d]]
    %v463 = vstv %s462
    %v464 = vmul.f32 %v463, %v55
    %v465 = vmul.f32 %v463, %v56
    %468 = vrot.lane.b32.xlu0 %v464, 126
    %v469 = vpop.permute.xlu0 %468
    %470 = vrot.lane.b32.xlu0 %v465, 126
    %v471 = vpop.permute.xlu0 %470
    %v474 = vadd.f32 %v460, %v469
    %v475 = vadd.f32 %v461, %v471
    %s476 = sld [smem:[#allocation6 + $0x1e]]
    %v477 = vstv %s476
    %v478 = vmul.f32 %v477, %v57
    %v479 = vmul.f32 %v477, %v58
    %v480 = vadd.f32 %v474, %v478
    %v481 = vadd.f32 %v475, %v479
    %s482 = sld [smem:[#allocation6 + $0x1f]]
    %v483 = vstv %s482
    %v484 = vmul.f32 %v483, %v57
    %v485 = vmul.f32 %v483, %v58
    %488 = vrot.lane.b32.xlu0 %v484, 127
    %v489 = vpop.permute.xlu0 %488
    %490 = vrot.lane.b32.xlu0 %v485, 127
    %v491 = vpop.permute.xlu0 %490
    %v494 = vadd.f32 %v480, %v489
    %v495 = vadd.f32 %v481, %v491
    %s496 = sld [smem:[#allocation6 + $0x20]]
    %v497 = vstv %s496
    %v498 = vmul.f32 %v497, %v57
    %v499 = vmul.f32 %v497, %v58
    %502 = vrot.lane.b32.xlu0 %v498, 126
    %v503 = vpop.permute.xlu0 %502
    %504 = vrot.lane.b32.xlu0 %v499, 126
    %v505 = vpop.permute.xlu0 %504
    %v508 = vadd.f32 %v494, %v503
    %v509 = vadd.f32 %v495, %v505
    %s510 = sld [smem:[#allocation6 + $0x21]]
    %v511 = vstv %s510
    %v512 = vmul.f32 %v511, %v59
    %v513 = vmul.f32 %v511, %v60
    %v514 = vadd.f32 %v508, %v512
    %v515 = vadd.f32 %v509, %v513
    %s516 = sld [smem:[#allocation6 + $0x22]]
    %v517 = vstv %s516
    %v518 = vmul.f32 %v517, %v59
    %v519 = vmul.f32 %v517, %v60
    %522 = vrot.lane.b32.xlu0 %v518, 127
    %v523 = vpop.permute.xlu0 %522
    %524 = vrot.lane.b32.xlu0 %v519, 127
    %v525 = vpop.permute.xlu0 %524
    %v528 = vadd.f32 %v514, %v523
    %v529 = vadd.f32 %v515, %v525
    %s530 = sld [smem:[#allocation6 + $0x23]]
    %v531 = vstv %s530
    %v532 = vmul.f32 %v531, %v59
    %v533 = vmul.f32 %v531, %v60
    %536 = vrot.lane.b32.xlu0 %v532, 126
    %v537 = vpop.permute.xlu0 %536
    %538 = vrot.lane.b32.xlu0 %v533, 126
    %v539 = vpop.permute.xlu0 %538
    %v542 = vadd.f32 %v528, %v537
    %v543 = vadd.f32 %v529, %v539
    %s544 = sld [smem:[#allocation6 + $0x24]]
    %v545 = vstv %s544
    %v546 = vmul.f32 %v545, %v62
    %v547 = vmul.f32 %v545, %v63
    %v548 = vadd.f32 %v542, %v546
    %v549 = vadd.f32 %v543, %v547
    %s550 = sld [smem:[#allocation6 + $0x25]]
    %v551 = vstv %s550
    %v552 = vmul.f32 %v551, %v62
    %v553 = vmul.f32 %v551, %v63
    %556 = vrot.lane.b32.xlu0 %v552, 127
    %v557 = vpop.permute.xlu0 %556
    %558 = vrot.lane.b32.xlu0 %v553, 127
    %v559 = vpop.permute.xlu0 %558
    %v562 = vadd.f32 %v548, %v557
    %v563 = vadd.f32 %v549, %v559
    %s564 = sld [smem:[#allocation6 + $0x26]]
    %v565 = vstv %s564
    %v566 = vmul.f32 %v565, %v62
    %v567 = vmul.f32 %v565, %v63
    %570 = vrot.lane.b32.xlu0 %v566, 126
    %v571 = vpop.permute.xlu0 %570
    %572 = vrot.lane.b32.xlu0 %v567, 126
    %v573 = vpop.permute.xlu0 %572
    %v576 = vadd.f32 %v562, %v571
    %v577 = vadd.f32 %v563, %v573
    %s578 = sld [smem:[#allocation6 + $0x27]]
    %v579 = vstv %s578
    %v580 = vmul.f32 %v579, %v64
    %v581 = vmul.f32 %v579, %v65
    %v582 = vadd.f32 %v576, %v580
    %v583 = vadd.f32 %v577, %v581
    %s584 = sld [smem:[#allocation6 + $0x28]]
    %v585 = vstv %s584
    %v586 = vmul.f32 %v585, %v64
    %v587 = vmul.f32 %v585, %v65
    %590 = vrot.lane.b32.xlu0 %v586, 127
    %v591 = vpop.permute.xlu0 %590
    %592 = vrot.lane.b32.xlu0 %v587, 127
    %v593 = vpop.permute.xlu0 %592
    %v596 = vadd.f32 %v582, %v591
    %v597 = vadd.f32 %v583, %v593
    %s598 = sld [smem:[#allocation6 + $0x29]]
    %v599 = vstv %s598
    %v600 = vmul.f32 %v599, %v64
    %v601 = vmul.f32 %v599, %v65
    %604 = vrot.lane.b32.xlu0 %v600, 126
    %v605 = vpop.permute.xlu0 %604
    %606 = vrot.lane.b32.xlu0 %v601, 126
    %v607 = vpop.permute.xlu0 %606
    %v610 = vadd.f32 %v596, %v605
    %v611 = vadd.f32 %v597, %v607
    %s612 = sld [smem:[#allocation6 + $0x2a]]
    %v613 = vstv %s612
    %v614 = vmul.f32 %v613, %v66
    %v615 = vmul.f32 %v613, %v67
    %v616 = vadd.f32 %v610, %v614
    %v617 = vadd.f32 %v611, %v615
    %s618 = sld [smem:[#allocation6 + $0x2b]]
    %v619 = vstv %s618
    %v620 = vmul.f32 %v619, %v66
    %v621 = vmul.f32 %v619, %v67
    %624 = vrot.lane.b32.xlu0 %v620, 127
    %v625 = vpop.permute.xlu0 %624
    %626 = vrot.lane.b32.xlu0 %v621, 127
    %v627 = vpop.permute.xlu0 %626
    %v630 = vadd.f32 %v616, %v625
    %v631 = vadd.f32 %v617, %v627
    %s632 = sld [smem:[#allocation6 + $0x2c]]
    %v633 = vstv %s632
    %v634 = vmul.f32 %v633, %v66
    %v635 = vmul.f32 %v633, %v67
    %638 = vrot.lane.b32.xlu0 %v634, 126
    %v639 = vpop.permute.xlu0 %638
    %640 = vrot.lane.b32.xlu0 %v635, 126
    %v641 = vpop.permute.xlu0 %640
    %v644 = vadd.f32 %v630, %v639
    %v645 = vadd.f32 %v631, %v641
    %s646 = sld [smem:[#allocation6 + $0x2d]]
    %v647 = vstv %s646
    %v648 = vmul.f32 %v647, %v69
    %v649 = vmul.f32 %v647, %v70
    %v650 = vadd.f32 %v644, %v648
    %v651 = vadd.f32 %v645, %v649
    %s652 = sld [smem:[#allocation6 + $0x2e]]
    %v653 = vstv %s652
    %v654 = vmul.f32 %v653, %v69
    %v655 = vmul.f32 %v653, %v70
    %658 = vrot.lane.b32.xlu0 %v654, 127
    %v659 = vpop.permute.xlu0 %658
    %660 = vrot.lane.b32.xlu0 %v655, 127
    %v661 = vpop.permute.xlu0 %660
    %v664 = vadd.f32 %v650, %v659
    %v665 = vadd.f32 %v651, %v661
    %s666 = sld [smem:[#allocation6 + $0x2f]]
    %v667 = vstv %s666
    %v668 = vmul.f32 %v667, %v69
    %v669 = vmul.f32 %v667, %v70
    %672 = vrot.lane.b32.xlu0 %v668, 126
    %v673 = vpop.permute.xlu0 %672
    %674 = vrot.lane.b32.xlu0 %v669, 126
    %v675 = vpop.permute.xlu0 %674
    %v678 = vadd.f32 %v664, %v673
    %v679 = vadd.f32 %v665, %v675
    %s680 = sld [smem:[#allocation6 + $0x30]]
    %v681 = vstv %s680
    %v682 = vmul.f32 %v681, %v71
    %v683 = vmul.f32 %v681, %v72
    %v684 = vadd.f32 %v678, %v682
    %v685 = vadd.f32 %v679, %v683
    %s686 = sld [smem:[#allocation6 + $0x31]]
    %v687 = vstv %s686
    %v688 = vmul.f32 %v687, %v71
    %v689 = vmul.f32 %v687, %v72
    %692 = vrot.lane.b32.xlu0 %v688, 127
    %v693 = vpop.permute.xlu0 %692
    %694 = vrot.lane.b32.xlu0 %v689, 127
    %v695 = vpop.permute.xlu0 %694
    %v698 = vadd.f32 %v684, %v693
    %v699 = vadd.f32 %v685, %v695
    %s700 = sld [smem:[#allocation6 + $0x32]]
    %v701 = vstv %s700
    %v702 = vmul.f32 %v701, %v71
    %v703 = vmul.f32 %v701, %v72
    %706 = vrot.lane.b32.xlu0 %v702, 126
    %v707 = vpop.permute.xlu0 %706
    %708 = vrot.lane.b32.xlu0 %v703, 126
    %v709 = vpop.permute.xlu0 %708
    %v712 = vadd.f32 %v698, %v707
    %v713 = vadd.f32 %v699, %v709
    %s714 = sld [smem:[#allocation6 + $0x33]]
    %v715 = vstv %s714
    %v716 = vmul.f32 %v715, %v73
    %v717 = vmul.f32 %v715, %v74
    %v718 = vadd.f32 %v712, %v716
    %v719 = vadd.f32 %v713, %v717
    %s720 = sld [smem:[#allocation6 + $0x34]]
    %v721 = vstv %s720
    %v722 = vmul.f32 %v721, %v73
    %v723 = vmul.f32 %v721, %v74
    %726 = vrot.lane.b32.xlu0 %v722, 127
    %v727 = vpop.permute.xlu0 %726
    %728 = vrot.lane.b32.xlu0 %v723, 127
    %v729 = vpop.permute.xlu0 %728
    %v732 = vadd.f32 %v718, %v727
    %v733 = vadd.f32 %v719, %v729
    %s734 = sld [smem:[#allocation6 + $0x35]]
    %v735 = vstv %s734
    %v736 = vmul.f32 %v735, %v73
    %v737 = vmul.f32 %v735, %v74
    %740 = vrot.lane.b32.xlu0 %v736, 126
    %v741 = vpop.permute.xlu0 %740
    %742 = vrot.lane.b32.xlu0 %v737, 126
    %v743 = vpop.permute.xlu0 %742
    %v746 = vadd.f32 %v732, %v741
    %v747 = vadd.f32 %v733, %v743
    %s748 = sld [smem:[#allocation7 + $0x1]]
    %v749 = vstv %s748
    %v750 = vadd.f32 %v746, %v749
    %v751 = vadd.f32 %v747, %v749
    %v752 = vsel %vm385, %v750, 0.0
    %v753 = vsel %vm385, %v751, 0.0
    %v754 = vadd.f32 %v752, %v753
    %755 = vadd.xlane.f32.xlu0 %v754
    %v756 = vpop.xlane.xlu0 %755
    %v757 = vrot.slane %v756, 4
    %v758 = vadd.f32 %v756, %v757
    %v759 = vrot.slane %v758, 2
    %v760 = vadd.f32 %v758, %v759
    %v761 = vrot.slane %v760, 1
    %v762 = vadd.f32 %v760, %v761
    %s763 = vtos %v762
    %v764 = vmul.f32 %v750, %v750
    %v765 = vmul.f32 %v751, %v751
    %v766 = vsel %vm385, %v764, 0.0
    %v767 = vsel %vm385, %v765, 0.0
    %v768 = vadd.f32 %v766, %v767
    %769 = vadd.xlane.f32.xlu0 %v768
    %v770 = vpop.xlane.xlu0 %769
    %v771 = vrot.slane %v770, 4
    %v772 = vadd.f32 %v770, %v771
    %v773 = vrot.slane %v772, 2
    %v774 = vadd.f32 %v772, %v773
    %v775 = vrot.slane %v774, 1
    %v776 = vadd.f32 %v774, %v775
    %s777 = vtos %v776
    %s778 = smul.f32 %s763, 0.013888889
    %s779 = smul.f32 %s777, 0.013888889
    %s780 = smul.f32 %s778, %s778
    %s781 = ssub.f32 %s779, %s780
    %s782 = sadd.f32 %s781, 1e-05
    %v783 = vstv %s782
    %v784 = vrsqrt.pop %v783
    %v785 = vmul.f32 %v784, %v783
    %v786 = vmul.f32 %v785, %v784
    %v787 = vmul.f32 0.5, %v786
    %v788 = vsub.f32 1.5, %v787
    %v789 = vmul.f32 %v784, %v788
    %vm790 = vweird.f32 %v783
    %vm791 = vweird.f32 %v784
    %vm792 = vmor %vm790, %vm791
    %v793 = vsel %vm792, %v784, %v789
    %s794 = vtos %v793
    %s795 = sld [smem:[#allocation7 + $0x4]]
    %s796 = smul.f32 %s794, %s795
    %s797 = sld [smem:[#allocation7 + $0x7]]
    %s798 = smul.f32 %s778, %s796
    %s799 = ssub.f32 %s797, %s798
    %v800 = vstv %s796
    %v801 = vmul.f32 %v750, %v800
    %v802 = vmul.f32 %v751, %v800
    %v803 = vstv %s799
    %v804 = vadd.f32 %v801, %v803
    %v805 = vadd.f32 %v802, %v803
    %s806 = scalar_lea.vmem %s3, 8
    %807 = vst.msk [vmem:[%s806] sm:$0x3f] %vm385, %v804
    %808 = vst.msk [vmem:[%s806 + $0x18] sm:$0x3f] %vm385, %v805
    %s809 = sld [smem:[#allocation6 + $0x36]]
    %v810 = vstv %s809
    %v811 = vmul.f32 %v810, %v55
    %v812 = vmul.f32 %v810, %v56
    %v813 = vadd.f32 %v811, 0.0
    %v814 = vadd.f32 %v812, 0.0
    %s815 = sld [smem:[#allocation6 + $0x37]]
    %v816 = vstv %s815
    %v817 = vmul.f32 %v816, %v55
    %v818 = vmul.f32 %v816, %v56
    %821 = vrot.lane.b32.xlu0 %v817, 127
    %v822 = vpop.permute.xlu0 %821
    %823 = vrot.lane.b32.xlu0 %v818, 127
    %v824 = vpop.permute.xlu0 %823
    %v827 = vadd.f32 %v813, %v822
    %v828 = vadd.f32 %v814, %v824
    %s829 = sld [smem:[#allocation6 + $0x38]]
    %v830 = vstv %s829
    %v831 = vmul.f32 %v830, %v55
    %v832 = vmul.f32 %v830, %v56
    %835 = vrot.lane.b32.xlu0 %v831, 126
    %v836 = vpop.permute.xlu0 %835
    %837 = vrot.lane.b32.xlu0 %v832, 126
    %v838 = vpop.permute.xlu0 %837
    %v841 = vadd.f32 %v827, %v836
    %v842 = vadd.f32 %v828, %v838
    %s843 = sld [smem:[#allocation6 + $0x39]]
    %v844 = vstv %s843
    %v845 = vmul.f32 %v844, %v57
    %v846 = vmul.f32 %v844, %v58
    %v847 = vadd.f32 %v841, %v845
    %v848 = vadd.f32 %v842, %v846
    %s849 = sld [smem:[#allocation6 + $0x3a]]
    %v850 = vstv %s849
    %v851 = vmul.f32 %v850, %v57
    %v852 = vmul.f32 %v850, %v58
    %855 = vrot.lane.b32.xlu0 %v851, 127
    %v856 = vpop.permute.xlu0 %855
    %857 = vrot.lane.b32.xlu0 %v852, 127
    %v858 = vpop.permute.xlu0 %857
    %v861 = vadd.f32 %v847, %v856
    %v862 = vadd.f32 %v848, %v858
    %s863 = sld [smem:[#allocation6 + $0x3b]]
    %v864 = vstv %s863
    %v865 = vmul.f32 %v864, %v57
    %v866 = vmul.f32 %v864, %v58
    %869 = vrot.lane.b32.xlu0 %v865, 126
    %v870 = vpop.permute.xlu0 %869
    %871 = vrot.lane.b32.xlu0 %v866, 126
    %v872 = vpop.permute.xlu0 %871
    %v875 = vadd.f32 %v861, %v870
    %v876 = vadd.f32 %v862, %v872
    %s877 = sld [smem:[#allocation6 + $0x3c]]
    %v878 = vstv %s877
    %v879 = vmul.f32 %v878, %v59
    %v880 = vmul.f32 %v878, %v60
    %v881 = vadd.f32 %v875, %v879
    %v882 = vadd.f32 %v876, %v880
    %s883 = sld [smem:[#allocation6 + $0x3d]]
    %v884 = vstv %s883
    %v885 = vmul.f32 %v884, %v59
    %v886 = vmul.f32 %v884, %v60
    %889 = vrot.lane.b32.xlu0 %v885, 127
    %v890 = vpop.permute.xlu0 %889
    %891 = vrot.lane.b32.xlu0 %v886, 127
    %v892 = vpop.permute.xlu0 %891
    %v895 = vadd.f32 %v881, %v890
    %v896 = vadd.f32 %v882, %v892
    %s897 = sld [smem:[#allocation6 + $0x3e]]
    %v898 = vstv %s897
    %v899 = vmul.f32 %v898, %v59
    %v900 = vmul.f32 %v898, %v60
    %903 = vrot.lane.b32.xlu0 %v899, 126
    %v904 = vpop.permute.xlu0 %903
    %905 = vrot.lane.b32.xlu0 %v900, 126
    %v906 = vpop.permute.xlu0 %905
    %v909 = vadd.f32 %v895, %v904
    %v910 = vadd.f32 %v896, %v906
    %s911 = sld [smem:[#allocation6 + $0x3f]]
    %v912 = vstv %s911
    %v913 = vmul.f32 %v912, %v62
    %v914 = vmul.f32 %v912, %v63
    %v915 = vadd.f32 %v909, %v913
    %v916 = vadd.f32 %v910, %v914
    %s917 = sld [smem:[#allocation6 + $0x40]]
    %v918 = vstv %s917
    %v919 = vmul.f32 %v918, %v62
    %v920 = vmul.f32 %v918, %v63
    %923 = vrot.lane.b32.xlu0 %v919, 127
    %v924 = vpop.permute.xlu0 %923
    %925 = vrot.lane.b32.xlu0 %v920, 127
    %v926 = vpop.permute.xlu0 %925
    %v929 = vadd.f32 %v915, %v924
    %v930 = vadd.f32 %v916, %v926
    %s931 = sld [smem:[#allocation6 + $0x41]]
    %v932 = vstv %s931
    %v933 = vmul.f32 %v932, %v62
    %v934 = vmul.f32 %v932, %v63
    %937 = vrot.lane.b32.xlu0 %v933, 126
    %v938 = vpop.permute.xlu0 %937
    %939 = vrot.lane.b32.xlu0 %v934, 126
    %v940 = vpop.permute.xlu0 %939
    %v943 = vadd.f32 %v929, %v938
    %v944 = vadd.f32 %v930, %v940
    %s945 = sld [smem:[#allocation6 + $0x42]]
    %v946 = vstv %s945
    %v947 = vmul.f32 %v946, %v64
    %v948 = vmul.f32 %v946, %v65
    %v949 = vadd.f32 %v943, %v947
    %v950 = vadd.f32 %v944, %v948
    %s951 = sld [smem:[#allocation6 + $0x43]]
    %v952 = vstv %s951
    %v953 = vmul.f32 %v952, %v64
    %v954 = vmul.f32 %v952, %v65
    %957 = vrot.lane.b32.xlu0 %v953, 127
    %v958 = vpop.permute.xlu0 %957
    %959 = vrot.lane.b32.xlu0 %v954, 127
    %v960 = vpop.permute.xlu0 %959
    %v963 = vadd.f32 %v949, %v958
    %v964 = vadd.f32 %v950, %v960
    %s965 = sld [smem:[#allocation6 + $0x44]]
    %v966 = vstv %s965
    %v967 = vmul.f32 %v966, %v64
    %v968 = vmul.f32 %v966, %v65
    %971 = vrot.lane.b32.xlu0 %v967, 126
    %v972 = vpop.permute.xlu0 %971
    %973 = vrot.lane.b32.xlu0 %v968, 126
    %v974 = vpop.permute.xlu0 %973
    %v977 = vadd.f32 %v963, %v972
    %v978 = vadd.f32 %v964, %v974
    %s979 = sld [smem:[#allocation6 + $0x45]]
    %v980 = vstv %s979
    %v981 = vmul.f32 %v980, %v66
    %v982 = vmul.f32 %v980, %v67
    %v983 = vadd.f32 %v977, %v981
    %v984 = vadd.f32 %v978, %v982
    %s985 = sld [smem:[#allocation6 + $0x46]]
    %v986 = vstv %s985
    %v987 = vmul.f32 %v986, %v66
    %v988 = vmul.f32 %v986, %v67
    %991 = vrot.lane.b32.xlu0 %v987, 127
    %v992 = vpop.permute.xlu0 %991
    %993 = vrot.lane.b32.xlu0 %v988, 127
    %v994 = vpop.permute.xlu0 %993
    %v997 = vadd.f32 %v983, %v992
    %v998 = vadd.f32 %v984, %v994
    %s999 = sld [smem:[#allocation6 + $0x47]]
    %v1000 = vstv %s999
    %v1001 = vmul.f32 %v1000, %v66
    %v1002 = vmul.f32 %v1000, %v67
    %1005 = vrot.lane.b32.xlu0 %v1001, 126
    %v1006 = vpop.permute.xlu0 %1005
    %1007 = vrot.lane.b32.xlu0 %v1002, 126
    %v1008 = vpop.permute.xlu0 %1007
    %v1011 = vadd.f32 %v997, %v1006
    %v1012 = vadd.f32 %v998, %v1008
    %s1013 = sld [smem:[#allocation6 + $0x48]]
    %v1014 = vstv %s1013
    %v1015 = vmul.f32 %v1014, %v69
    %v1016 = vmul.f32 %v1014, %v70
    %v1017 = vadd.f32 %v1011, %v1015
    %v1018 = vadd.f32 %v1012, %v1016
    %s1019 = sld [smem:[#allocation6 + $0x49]]
    %v1020 = vstv %s1019
    %v1021 = vmul.f32 %v1020, %v69
    %v1022 = vmul.f32 %v1020, %v70
    %1025 = vrot.lane.b32.xlu0 %v1021, 127
    %v1026 = vpop.permute.xlu0 %1025
    %1027 = vrot.lane.b32.xlu0 %v1022, 127
    %v1028 = vpop.permute.xlu0 %1027
    %v1031 = vadd.f32 %v1017, %v1026
    %v1032 = vadd.f32 %v1018, %v1028
    %s1033 = sld [smem:[#allocation6 + $0x4a]]
    %v1034 = vstv %s1033
    %v1035 = vmul.f32 %v1034, %v69
    %v1036 = vmul.f32 %v1034, %v70
    %1039 = vrot.lane.b32.xlu0 %v1035, 126
    %v1040 = vpop.permute.xlu0 %1039
    %1041 = vrot.lane.b32.xlu0 %v1036, 126
    %v1042 = vpop.permute.xlu0 %1041
    %v1045 = vadd.f32 %v1031, %v1040
    %v1046 = vadd.f32 %v1032, %v1042
    %s1047 = sld [smem:[#allocation6 + $0x4b]]
    %v1048 = vstv %s1047
    %v1049 = vmul.f32 %v1048, %v71
    %v1050 = vmul.f32 %v1048, %v72
    %v1051 = vadd.f32 %v1045, %v1049
    %v1052 = vadd.f32 %v1046, %v1050
    %s1053 = sld [smem:[#allocation6 + $0x4c]]
    %v1054 = vstv %s1053
    %v1055 = vmul.f32 %v1054, %v71
    %v1056 = vmul.f32 %v1054, %v72
    %1059 = vrot.lane.b32.xlu0 %v1055, 127
    %v1060 = vpop.permute.xlu0 %1059
    %1061 = vrot.lane.b32.xlu0 %v1056, 127
    %v1062 = vpop.permute.xlu0 %1061
    %v1065 = vadd.f32 %v1051, %v1060
    %v1066 = vadd.f32 %v1052, %v1062
    %s1067 = sld [smem:[#allocation6 + $0x4d]]
    %v1068 = vstv %s1067
    %v1069 = vmul.f32 %v1068, %v71
    %v1070 = vmul.f32 %v1068, %v72
    %1073 = vrot.lane.b32.xlu0 %v1069, 126
    %v1074 = vpop.permute.xlu0 %1073
    %1075 = vrot.lane.b32.xlu0 %v1070, 126
    %v1076 = vpop.permute.xlu0 %1075
    %v1079 = vadd.f32 %v1065, %v1074
    %v1080 = vadd.f32 %v1066, %v1076
    %s1081 = sld [smem:[#allocation6 + $0x4e]]
    %v1082 = vstv %s1081
    %v1083 = vmul.f32 %v1082, %v73
    %v1084 = vmul.f32 %v1082, %v74
    %v1085 = vadd.f32 %v1079, %v1083
    %v1086 = vadd.f32 %v1080, %v1084
    %s1087 = sld [smem:[#allocation6 + $0x4f]]
    %v1088 = vstv %s1087
    %v1089 = vmul.f32 %v1088, %v73
    %v1090 = vmul.f32 %v1088, %v74
    %1093 = vrot.lane.b32.xlu0 %v1089, 127
    %v1094 = vpop.permute.xlu0 %1093
    %1095 = vrot.lane.b32.xlu0 %v1090, 127
    %v1096 = vpop.permute.xlu0 %1095
    %v1099 = vadd.f32 %v1085, %v1094
    %v1100 = vadd.f32 %v1086, %v1096
    %s1101 = sld [smem:[#allocation6 + $0x50]]
    %v1102 = vstv %s1101
    %v1103 = vmul.f32 %v1102, %v73
    %v1104 = vmul.f32 %v1102, %v74
    %1107 = vrot.lane.b32.xlu0 %v1103, 126
    %v1108 = vpop.permute.xlu0 %1107
    %1109 = vrot.lane.b32.xlu0 %v1104, 126
    %v1110 = vpop.permute.xlu0 %1109
    %v1113 = vadd.f32 %v1099, %v1108
    %v1114 = vadd.f32 %v1100, %v1110
    %s1115 = sld [smem:[#allocation7 + $0x2]]
    %v1116 = vstv %s1115
    %v1117 = vadd.f32 %v1113, %v1116
    %v1118 = vadd.f32 %v1114, %v1116
    %v1119 = vsel %vm385, %v1117, 0.0
    %v1120 = vsel %vm385, %v1118, 0.0
    %v1121 = vadd.f32 %v1119, %v1120
    %1122 = vadd.xlane.f32.xlu0 %v1121
    %v1123 = vpop.xlane.xlu0 %1122
    %v1124 = vrot.slane %v1123, 4
    %v1125 = vadd.f32 %v1123, %v1124
    %v1126 = vrot.slane %v1125, 2
    %v1127 = vadd.f32 %v1125, %v1126
    %v1128 = vrot.slane %v1127, 1
    %v1129 = vadd.f32 %v1127, %v1128
    %s1130 = vtos %v1129
    %v1131 = vmul.f32 %v1117, %v1117
    %v1132 = vmul.f32 %v1118, %v1118
    %v1133 = vsel %vm385, %v1131, 0.0
    %v1134 = vsel %vm385, %v1132, 0.0
    %v1135 = vadd.f32 %v1133, %v1134
    %1136 = vadd.xlane.f32.xlu0 %v1135
    %v1137 = vpop.xlane.xlu0 %1136
    %v1138 = vrot.slane %v1137, 4
    %v1139 = vadd.f32 %v1137, %v1138
    %v1140 = vrot.slane %v1139, 2
    %v1141 = vadd.f32 %v1139, %v1140
    %v1142 = vrot.slane %v1141, 1
    %v1143 = vadd.f32 %v1141, %v1142
    %s1144 = vtos %v1143
    %s1145 = smul.f32 %s1130, 0.013888889
    %s1146 = smul.f32 %s1144, 0.013888889
    %s1147 = smul.f32 %s1145, %s1145
    %s1148 = ssub.f32 %s1146, %s1147
    %s1149 = sadd.f32 %s1148, 1e-05
    %v1150 = vstv %s1149
    %v1151 = vrsqrt.pop %v1150
    %v1152 = vmul.f32 %v1151, %v1150
    %v1153 = vmul.f32 %v1152, %v1151
    %v1154 = vmul.f32 0.5, %v1153
    %v1155 = vsub.f32 1.5, %v1154
    %v1156 = vmul.f32 %v1151, %v1155
    %vm1157 = vweird.f32 %v1150
    %vm1158 = vweird.f32 %v1151
    %vm1159 = vmor %vm1157, %vm1158
    %v1160 = vsel %vm1159, %v1151, %v1156
    %s1161 = vtos %v1160
    %s1162 = sld [smem:[#allocation7 + $0x5]]
    %s1163 = smul.f32 %s1161, %s1162
    %s1164 = sld [smem:[#allocation7 + $0x8]]
    %s1165 = smul.f32 %s1145, %s1163
    %s1166 = ssub.f32 %s1164, %s1165
    %v1167 = vstv %s1163
    %v1168 = vmul.f32 %v1117, %v1167
    %v1169 = vmul.f32 %v1118, %v1167
    %v1170 = vstv %s1166
    %v1171 = vadd.f32 %v1168, %v1170
    %v1172 = vadd.f32 %v1169, %v1170
    %s1173 = scalar_lea.vmem %s3, 16
    %1174 = vst.msk [vmem:[%s1173] sm:$0x3f] %vm385, %v1171
    %1175 = vst.msk [vmem:[%s1173 + $0x18] sm:$0x3f] %vm385, %v1172
    // Predicated region
    $region26: #{tpu_custom_call.1} parent=1 // pred_check
      _
    $region27: #{tpu_custom_call.1} parent=1 // pred_check_branch
      %1177 = sbr.rel (0) target = $region29
    $region28: #{tpu_custom_call.1} parent=1 // pred_region
      _
    $region29: #{tpu_custom_call.1} parent=1 // pred_fallthru
      _
    // Predicated region
    $region30: #{tpu_custom_call.1} parent=1 // pred_check
      _
    $region31: #{tpu_custom_call.1} parent=1 // pred_check_branch
      %1179 = sbr.rel (0) target = $region33
    $region32: #{tpu_custom_call.1} parent=1 // pred_region
      _
    $region33: #{tpu_custom_call.1} parent=1 // pred_fallthru
      _
    %1180 = vsyncpa [#allocation3], 1
    %1181 = vsyncpa [#allocation4], 1
    %1182 = vsyncpa [#allocation5], 1

</llo_original>
